<compile_context>
chip_gen: v6e
topology: v6e:2x2x1
jax: 0.10.0
libtpu: 0.0.40
codegen_flags: <defaults>
</compile_context>

<pallas_src>
import functools

import jax
import jax.numpy as jnp
from jax.experimental import pallas as pl
from jax.experimental.pallas import tpu as pltpu


_LANE = 128


def _round_up(v, m):
    return (v + m - 1) // m * m


def _fs(shape):
    """Full-array BlockSpec for a grid=(1,) kernel."""
    zeros = (0,) * len(shape)
    return pl.BlockSpec(shape, lambda i, _z=zeros: _z)


# ----------------------------- fused kernel --------------------------------


def _fused_seconv_kernel(
    x_ref, nattr_ref, deg_ref, adj_ref, ce_ref,
    ew_ref, eb_ref, lwi_ref, lwj_ref, lwe_ref,
    w1_ref, b1_ref, w2_ref, b2_ref,
    o_ref, h_ref,
):
    """embedding -> L x SEConv (linear, scalar irreps, aggr='add') -> head."""
    nattr = nattr_ref[...]                                        # (Np, 1)

    # embedding_layer: O3TensorProduct(x, node_attr) == (x * attr) @ We + be
    h_ref[...] = (
        jnp.dot(x_ref[...] * nattr, ew_ref[...],
                preferred_element_type=jnp.float32) + eb_ref[...]
    )

    n_layers = lwi_ref.shape[0]

    def _layer(l, carry):
        h = h_ref[...]                                            # (Np, Hp)
        # neighbour sum:  (adj @ h)[n] = sum_{e: dst=n} eattr_e * h[src_e]
        ah = jnp.dot(adj_ref[...], h, preferred_element_type=jnp.float32)
        # agg = deg⊙(h@W_i) + (adj@h)@W_j + c_ext@[W_a ; b]
        agg = (
            deg_ref[...] * jnp.dot(h, lwi_ref[l],
                                   preferred_element_type=jnp.float32)
            + jnp.dot(ah, lwj_ref[l], preferred_element_type=jnp.float32)
            + jnp.dot(ce_ref[...], lwe_ref[l],
                      preferred_element_type=jnp.float32)
        )
        # update(): x += O3SwishGate(agg) == x += SiLU(agg) on scalar irreps
        h_ref[...] = h + agg * jax.nn.sigmoid(agg)
        return carry

    jax.lax.fori_loop(0, n_layers, _layer, 0)

    # output_layer_1 (TP + SwishGate) then output_layer_2 (TP), fused.
    h = h_ref[...]
    t = (jnp.dot(h * nattr, w1_ref[...], preferred_element_type=jnp.float32)
         + b1_ref[...])
    t = t * jax.nn.sigmoid(t)
    o_ref[...] = (
        jnp.dot(t * nattr, w2_ref[...], preferred_element_type=jnp.float32)
        + b2_ref[...]
    )


# ------------------------------ wrappers ------------------------------------


def _pad2(a, rows, cols):
    return jnp.pad(a, ((0, rows - a.shape[0]), (0, cols - a.shape[1])))


@functools.partial(jax.jit, static_argnames=("n_nodes",))
def seconv_model_forward(params, x, edge_index, amf, node_attr, edge_attr,
                         n_nodes):
    n = n_nodes
    e = edge_index.shape[1]
    in_dim = x.shape[1]
    hidden = params["embed_w"].shape[1]
    out_dim = params["out2_w"].shape[1]
    a_dim = amf.shape[1]
    n_layers = len(params["layers"])

    # Node axis padded to a lane multiple (adjacency last dim is node axis).
    n_p = _round_up(n, _LANE)
    in_p = _round_up(in_dim, _LANE)
    h_p = _round_up(hidden, _LANE)
    ae_p = _round_up(a_dim + 1, _LANE)          # amf channels + bias column
    out_p = _round_up(out_dim, _LANE)

    # PyG flow 'source_to_target': x_j = x[edge_index[0]], x_i = x[edge_index[1]],
    # aggregation over the target index edge_index[1].
    src, dst = edge_index[0], edge_index[1]
    ea = edge_attr[:, 0]                                          # (E,)

    # Node-space graph operators, built once (padded rows/cols are zero).
    adj = jnp.zeros((n_p, n_p), jnp.float32).at[dst, src].add(ea)
    deg = jnp.zeros((n_p, 1), jnp.float32).at[dst, 0].add(ea)
    c_amf = jnp.zeros((n_p, a_dim), jnp.float32).at[dst].add(edge_attr * amf)
    cnt = jnp.zeros((n_p, 1), jnp.float32).at[dst, 0].add(
        jnp.ones((e,), jnp.float32))
    c_ext = jnp.pad(jnp.concatenate([c_amf, cnt], axis=1),
                    ((0, 0), (0, ae_p - (a_dim + 1))))            # (Np, Aep)

    x_pad = _pad2(x, n_p, in_p)
    nattr_pad = _pad2(node_attr, n_p, 1)

    ew = _pad2(params["embed_w"], in_p, h_p)
    eb = _pad2(params["embed_b"], 1, h_p)

    # Split each layer's (2H + A, H) message weight into tight K-blocks and
    # fold the bias into the amf block ([W_a ; b] matches c_ext's ones column).
    lwi_l, lwj_l, lwe_l = [], [], []
    for lyr in params["layers"]:
        w, b = lyr["w"], lyr["b"]
        lwi_l.append(_pad2(w[:hidden], h_p, h_p))
        lwj_l.append(_pad2(w[hidden:2 * hidden], h_p, h_p))
        we = jnp.concatenate([w[2 * hidden:2 * hidden + a_dim], b], axis=0)
        lwe_l.append(_pad2(we, ae_p, h_p))
    lwi = jnp.stack(lwi_l)                                        # (L, Hp, Hp)
    lwj = jnp.stack(lwj_l)                                        # (L, Hp, Hp)
    lwe = jnp.stack(lwe_l)                                        # (L, Aep, Hp)

    w1 = _pad2(params["out1_w"], h_p, h_p)
    b1 = _pad2(params["out1_b"], 1, h_p)
    w2 = _pad2(params["out2_w"], h_p, out_p)
    b2 = _pad2(params["out2_b"], 1, out_p)

    operands = (x_pad, nattr_pad, deg, adj, c_ext, ew, eb, lwi, lwj, lwe,
                w1, b1, w2, b2)
    resident_bytes = sum(int(o.size) * 4 for o in operands)
    resident_bytes += (n_p * out_p + n_p * h_p) * 4               # output + scratch
    # 2x for default double-buffering of in/out specs + headroom; floor above
    # v5e's 16 MiB scoped default, ceiling under v7x's 64 MiB physical VMEM.
    vmem_limit = int(min(max(2 * resident_bytes + (4 << 20), 32 << 20),
                         56 << 20))

    out_pad = pl.pallas_call(
        _fused_seconv_kernel,
        out_shape=jax.ShapeDtypeStruct((n_p, out_p), jnp.float32),
        grid=(1,),
        in_specs=[
            _fs((n_p, in_p)), _fs((n_p, 1)), _fs((n_p, 1)), _fs((n_p, n_p)),
            _fs((n_p, ae_p)),
            _fs((in_p, h_p)), _fs((1, h_p)),
            _fs((n_layers, h_p, h_p)), _fs((n_layers, h_p, h_p)),
            _fs((n_layers, ae_p, h_p)),
            _fs((h_p, h_p)), _fs((1, h_p)),
            _fs((h_p, out_p)), _fs((1, out_p)),
        ],
        out_specs=_fs((n_p, out_p)),
        scratch_shapes=[pltpu.VMEM((n_p, h_p), jnp.float32)],
        compiler_params=pltpu.CompilerParams(
            dimension_semantics=("arbitrary",),
            vmem_limit_bytes=vmem_limit),
    )(*operands)

    return out_pad[:n, :out_dim]


# ------------------------------ model params --------------------------------


def init_params(key, in_dim, hidden, out_dim, n_layers, amf_dim=2):
    ks = jax.random.split(key, 3 + n_layers)
    k = iter(ks)

    def lin(kk, cin, cout):
        return jax.random.normal(kk, (cin, cout), jnp.float32) / jnp.sqrt(cin)

    params = {
        "embed_w": lin(next(k), in_dim, hidden),
        "embed_b": jnp.zeros((1, hidden), jnp.float32),
        "layers": [],
        "out1_w": lin(next(k), hidden, hidden),
        "out1_b": jnp.zeros((1, hidden), jnp.float32),
        "out2_w": lin(next(k), hidden, out_dim),
        "out2_b": jnp.zeros((1, out_dim), jnp.float32),
    }
    for _ in range(n_layers):
        params["layers"].append({
            # single O3TensorProduct weight over concat(x_i, x_j, amf)
            "w": lin(next(k), 2 * hidden + amf_dim, hidden),
            "b": jnp.zeros((1, hidden), jnp.float32),
        })
    return params


def reference_forward(params, x, edge_index, amf, node_attr, edge_attr):
    """Pure-JAX reference (index gather + segment_sum), matches the module."""
    hp = jax.lax.Precision.HIGHEST
    src, dst = edge_index[0], edge_index[1]
    n = x.shape[0]
    h = jnp.dot(x * node_attr, params["embed_w"], precision=hp) + params["embed_b"]
    for lyr in params["layers"]:
        x_i, x_j = h[dst], h[src]
        m_in = jnp.concatenate([x_i, x_j, amf], axis=-1) * edge_attr
        msg = jnp.dot(m_in, lyr["w"], precision=hp) + lyr["b"]
        agg = jax.ops.segment_sum(msg, dst, num_segments=n)
        h = h + agg * jax.nn.sigmoid(agg)
    t = jnp.dot(h * node_attr, params["out1_w"], precision=hp) + params["out1_b"]
    t = t * jax.nn.sigmoid(t)
    return jnp.dot(t * node_attr, params["out2_w"], precision=hp) + params["out2_b"]


if __name__ == "__main__":
    N_NODES = 8
    N_EDGES = 16
    IN_DIM = 4
    HIDDEN = 32
    OUT_DIM = 4
    N_LAYERS = 2

    key = jax.random.PRNGKey(0)
    kx, ke, ka, kn, ked, kp = jax.random.split(key, 6)

    x = jax.random.normal(kx, (N_NODES, IN_DIM), jnp.float32)
    edge_index = jax.random.randint(ke, (2, N_EDGES), 0, N_NODES, jnp.int32)
    additional_message_features = jax.random.normal(
        ka, (N_EDGES, 2), jnp.float32)                            # '2x0e'
    # Scalar (0e) attributes; use non-uniform positive values so the weighted
    # adjacency / degree / bias-count paths are all exercised distinctly.
    node_attr = jax.random.uniform(kn, (N_NODES, 1), jnp.float32, 0.5, 1.5)
    edge_attr = jax.random.uniform(ked, (N_EDGES, 1), jnp.float32, 0.5, 1.5)

    params = init_params(kp, IN_DIM, HIDDEN, OUT_DIM, N_LAYERS)

    out = seconv_model_forward(params, x, edge_index,
                               additional_message_features,
                               node_attr, edge_attr, n_nodes=N_NODES)
    jax.block_until_ready(out)
    assert out.shape == (N_NODES, OUT_DIM)

    ref = reference_forward(params, x, edge_index,
                            additional_message_features, node_attr, edge_attr)
    assert bool(jnp.all(jnp.isfinite(out)))
    assert bool(jnp.allclose(out, ref, rtol=1e-2, atol=1e-2)), (
        float(jnp.max(jnp.abs(out - ref))))
    print("KERNEL_OK")
</pallas_src>

<mosaic_0001>
module attributes {stable_mosaic.version = 11 : i64} {
  func.func private @main(%arg0: i32) attributes {dimension_semantics = [#tpu.dimension_semantics<core_parallel>], iteration_bounds = array<i64: 2>, tpu.core_type = #tpu.core_type<sc_scalar_subcore>, window_params = []} {
    return
  }
}

module attributes {stable_mosaic.version = 11 : i64} {
  func.func private @main(%arg0: i32) attributes {dimension_semantics = [#tpu.dimension_semantics<core_parallel>], iteration_bounds = array<i64: 2>, tpu.core_type = #tpu.core_type<sc_scalar_subcore>, window_params = []} {
    return
  }
}

module attributes {stable_mosaic.version = 11 : i64} {
  func.func @_fused_seconv_kernel(%arg0: i32, %arg1: memref<128x128xf32, #tpu.memory_space<vmem>>, %arg2: memref<128x1xf32, #tpu.memory_space<vmem>>, %arg3: memref<128x1xf32, #tpu.memory_space<vmem>>, %arg4: memref<128x128xf32, #tpu.memory_space<vmem>>, %arg5: memref<128x128xf32, #tpu.memory_space<vmem>>, %arg6: memref<128x128xf32, #tpu.memory_space<vmem>>, %arg7: memref<1x128xf32, #tpu.memory_space<vmem>>, %arg8: memref<2x128x128xf32, #tpu.memory_space<vmem>>, %arg9: memref<2x128x128xf32, #tpu.memory_space<vmem>>, %arg10: memref<2x128x128xf32, #tpu.memory_space<vmem>>, %arg11: memref<128x128xf32, #tpu.memory_space<vmem>>, %arg12: memref<1x128xf32, #tpu.memory_space<vmem>>, %arg13: memref<128x128xf32, #tpu.memory_space<vmem>>, %arg14: memref<1x128xf32, #tpu.memory_space<vmem>>, %arg15: memref<128x128xf32, #tpu.memory_space<vmem>>, %arg16: memref<128x128xf32, #tpu.memory_space<vmem>>) attributes {dimension_semantics = [#tpu.dimension_semantics<arbitrary>], iteration_bounds = array<i64: 1>, scalar_prefetch = 0 : i64, scratch_operands = 1 : i64, tpu.core_type = #tpu.core_type<tc>, window_params = [{pipeline_mode = #tpu.pipeline_mode<synchronous>, transform_indices = @transform_0, window_bounds = array<i64: 128, 128>}, {pipeline_mode = #tpu.pipeline_mode<synchronous>, transform_indices = @transform_1, window_bounds = array<i64: 128, 1>}, {pipeline_mode = #tpu.pipeline_mode<synchronous>, transform_indices = @transform_2, window_bounds = array<i64: 128, 1>}, {pipeline_mode = #tpu.pipeline_mode<synchronous>, transform_indices = @transform_3, window_bounds = array<i64: 128, 128>}, {pipeline_mode = #tpu.pipeline_mode<synchronous>, transform_indices = @transform_4, window_bounds = array<i64: 128, 128>}, {pipeline_mode = #tpu.pipeline_mode<synchronous>, transform_indices = @transform_5, window_bounds = array<i64: 128, 128>}, {pipeline_mode = #tpu.pipeline_mode<synchronous>, transform_indices = @transform_6, window_bounds = array<i64: 1, 128>}, {pipeline_mode = #tpu.pipeline_mode<synchronous>, transform_indices = @transform_7, window_bounds = array<i64: 2, 128, 128>}, {pipeline_mode = #tpu.pipeline_mode<synchronous>, transform_indices = @transform_8, window_bounds = array<i64: 2, 128, 128>}, {pipeline_mode = #tpu.pipeline_mode<synchronous>, transform_indices = @transform_9, window_bounds = array<i64: 2, 128, 128>}, {pipeline_mode = #tpu.pipeline_mode<synchronous>, transform_indices = @transform_10, window_bounds = array<i64: 128, 128>}, {pipeline_mode = #tpu.pipeline_mode<synchronous>, transform_indices = @transform_11, window_bounds = array<i64: 1, 128>}, {pipeline_mode = #tpu.pipeline_mode<synchronous>, transform_indices = @transform_12, window_bounds = array<i64: 128, 128>}, {pipeline_mode = #tpu.pipeline_mode<synchronous>, transform_indices = @transform_13, window_bounds = array<i64: 1, 128>}, {pipeline_mode = #tpu.pipeline_mode<synchronous>, transform_indices = @transform_14, window_bounds = array<i64: 128, 128>}]} {
    %c0 = arith.constant 0 : index
    %c0_0 = arith.constant 0 : index
    %0 = vector.load %arg2[%c0, %c0_0] : memref<128x1xf32, #tpu.memory_space<vmem>>, vector<128x1xf32>
    %c0_1 = arith.constant 0 : index
    %c0_2 = arith.constant 0 : index
    %1 = vector.load %arg1[%c0_1, %c0_2] : memref<128x128xf32, #tpu.memory_space<vmem>>, vector<128x128xf32>
    %2 = vector.broadcast %0 : vector<128x1xf32> to vector<128x128xf32>
    %3 = arith.mulf %1, %2 : vector<128x128xf32>
    %c0_3 = arith.constant 0 : index
    %c0_4 = arith.constant 0 : index
    %4 = vector.load %arg6[%c0_3, %c0_4] : memref<128x128xf32, #tpu.memory_space<vmem>>, vector<128x128xf32>
    %cst = arith.constant dense<0.000000e+00> : vector<128x128xf32>
    %5 = tpu.matmul %3, %4, %cst {dimension_numbers = #tpu.dot_dimension_numbers<[1], [0], [0], [1], [0, 0, 1, 1], [], []>} : vector<128x128xf32>, vector<128x128xf32>, vector<128x128xf32> -> vector<128x128xf32>
    %c0_5 = arith.constant 0 : index
    %c0_6 = arith.constant 0 : index
    %6 = vector.load %arg7[%c0_5, %c0_6] : memref<1x128xf32, #tpu.memory_space<vmem>>, vector<1x128xf32>
    %7 = vector.broadcast %6 : vector<1x128xf32> to vector<128x128xf32>
    %8 = arith.addf %5, %7 : vector<128x128xf32>
    %c0_7 = arith.constant 0 : index
    %c0_8 = arith.constant 0 : index
    %9 = vector.load %arg16[%c0_7, %c0_8] : memref<128x128xf32, #tpu.memory_space<vmem>>, vector<128x128xf32>
    tpu.vector_store %arg16[%c0_7, %c0_8], %8 {strides = array<i32>} : memref<128x128xf32, #tpu.memory_space<vmem>>, vector<128x128xf32>,
    %c0_i32 = arith.constant 0 : i32
    %c2_i32 = arith.constant 2 : i32
    %10 = arith.addi %c0_i32, %c2_i32 : i32
    %c1_i32 = arith.constant 1 : i32
    scf.for %arg17 = %c0_i32 to %10 step %c1_i32  : i32 {
      %c0_25 = arith.constant 0 : index
      %c0_26 = arith.constant 0 : index
      %33 = vector.load %arg16[%c0_25, %c0_26] : memref<128x128xf32, #tpu.memory_space<vmem>>, vector<128x128xf32>
      %c0_27 = arith.constant 0 : index
      %c0_28 = arith.constant 0 : index
      %34 = vector.load %arg4[%c0_27, %c0_28] : memref<128x128xf32, #tpu.memory_space<vmem>>, vector<128x128xf32>
      %cst_29 = arith.constant dense<0.000000e+00> : vector<128x128xf32>
      %35 = tpu.matmul %34, %33, %cst_29 {dimension_numbers = #tpu.dot_dimension_numbers<[1], [0], [0], [1], [0, 0, 1, 1], [], []>} : vector<128x128xf32>, vector<128x128xf32>, vector<128x128xf32> -> vector<128x128xf32>
      %c0_30 = arith.constant 0 : index
      %c0_31 = arith.constant 0 : index
      %36 = vector.load %arg3[%c0_30, %c0_31] : memref<128x1xf32, #tpu.memory_space<vmem>>, vector<128x1xf32>
      %37 = arith.index_cast %arg17 : i32 to index
      %c0_32 = arith.constant 0 : index
      %c0_33 = arith.constant 0 : index
      %38 = vector.load %arg8[%37, %c0_32, %c0_33] : memref<2x128x128xf32, #tpu.memory_space<vmem>>, vector<1x128x128xf32>
      %39 = vector.shape_cast %38 : vector<1x128x128xf32> to vector<128x128xf32>
      %cst_34 = arith.constant dense<0.000000e+00> : vector<128x128xf32>
      %40 = tpu.matmul %33, %39, %cst_34 {dimension_numbers = #tpu.dot_dimension_numbers<[1], [0], [0], [1], [0, 0, 1, 1], [], []>} : vector<128x128xf32>, vector<128x128xf32>, vector<128x128xf32> -> vector<128x128xf32>
      %41 = vector.broadcast %36 : vector<128x1xf32> to vector<128x128xf32>
      %42 = arith.mulf %41, %40 : vector<128x128xf32>
      %43 = arith.index_cast %arg17 : i32 to index
      %c0_35 = arith.constant 0 : index
      %c0_36 = arith.constant 0 : index
      %44 = vector.load %arg9[%43, %c0_35, %c0_36] : memref<2x128x128xf32, #tpu.memory_space<vmem>>, vector<1x128x128xf32>
      %45 = vector.shape_cast %44 : vector<1x128x128xf32> to vector<128x128xf32>
      %cst_37 = arith.constant dense<0.000000e+00> : vector<128x128xf32>
      %46 = tpu.matmul %35, %45, %cst_37 {dimension_numbers = #tpu.dot_dimension_numbers<[1], [0], [0], [1], [0, 0, 1, 1], [], []>} : vector<128x128xf32>, vector<128x128xf32>, vector<128x128xf32> -> vector<128x128xf32>
      %47 = arith.addf %42, %46 : vector<128x128xf32>
      %c0_38 = arith.constant 0 : index
      %c0_39 = arith.constant 0 : index
      %48 = vector.load %arg5[%c0_38, %c0_39] : memref<128x128xf32, #tpu.memory_space<vmem>>, vector<128x128xf32>
      %49 = arith.index_cast %arg17 : i32 to index
      %c0_40 = arith.constant 0 : index
      %c0_41 = arith.constant 0 : index
      %50 = vector.load %arg10[%49, %c0_40, %c0_41] : memref<2x128x128xf32, #tpu.memory_space<vmem>>, vector<1x128x128xf32>
      %51 = vector.shape_cast %50 : vector<1x128x128xf32> to vector<128x128xf32>
      %cst_42 = arith.constant dense<0.000000e+00> : vector<128x128xf32>
      %52 = tpu.matmul %48, %51, %cst_42 {dimension_numbers = #tpu.dot_dimension_numbers<[1], [0], [0], [1], [0, 0, 1, 1], [], []>} : vector<128x128xf32>, vector<128x128xf32>, vector<128x128xf32> -> vector<128x128xf32>
      %53 = arith.addf %47, %52 : vector<128x128xf32>
      %54 = arith.negf %53 : vector<128x128xf32>
      %55 = math.exp %54 : vector<128x128xf32>
      %cst_43 = arith.constant 1.000000e+00 : f32
      %56 = vector.broadcast %cst_43 : f32 to vector<128x128xf32>
      %57 = arith.addf %56, %55 : vector<128x128xf32>
      %58 = arith.divf %56, %57 : vector<128x128xf32>
      %59 = arith.mulf %53, %58 : vector<128x128xf32>
      %60 = arith.addf %33, %59 : vector<128x128xf32>
      %c0_44 = arith.constant 0 : index
      %c0_45 = arith.constant 0 : index
      %61 = vector.load %arg16[%c0_44, %c0_45] : memref<128x128xf32, #tpu.memory_space<vmem>>, vector<128x128xf32>
      tpu.vector_store %arg16[%c0_44, %c0_45], %60 {strides = array<i32>} : memref<128x128xf32, #tpu.memory_space<vmem>>, vector<128x128xf32>,
    }
    %c2_i32_9 = arith.constant 2 : i32
    %c0_10 = arith.constant 0 : index
    %c0_11 = arith.constant 0 : index
    %11 = vector.load %arg16[%c0_10, %c0_11] : memref<128x128xf32, #tpu.memory_space<vmem>>, vector<128x128xf32>
    %12 = vector.broadcast %0 : vector<128x1xf32> to vector<128x128xf32>
    %13 = arith.mulf %11, %12 : vector<128x128xf32>
    %c0_12 = arith.constant 0 : index
    %c0_13 = arith.constant 0 : index
    %14 = vector.load %arg11[%c0_12, %c0_13] : memref<128x128xf32, #tpu.memory_space<vmem>>, vector<128x128xf32>
    %cst_14 = arith.constant dense<0.000000e+00> : vector<128x128xf32>
    %15 = tpu.matmul %13, %14, %cst_14 {dimension_numbers = #tpu.dot_dimension_numbers<[1], [0], [0], [1], [0, 0, 1, 1], [], []>} : vector<128x128xf32>, vector<128x128xf32>, vector<128x128xf32> -> vector<128x128xf32>
    %c0_15 = arith.constant 0 : index
    %c0_16 = arith.constant 0 : index
    %16 = vector.load %arg12[%c0_15, %c0_16] : memref<1x128xf32, #tpu.memory_space<vmem>>, vector<1x128xf32>
    %17 = vector.broadcast %16 : vector<1x128xf32> to vector<128x128xf32>
    %18 = arith.addf %15, %17 : vector<128x128xf32>
    %19 = arith.negf %18 : vector<128x128xf32>
    %20 = math.exp %19 : vector<128x128xf32>
    %cst_17 = arith.constant 1.000000e+00 : f32
    %21 = vector.broadcast %cst_17 : f32 to vector<128x128xf32>
    %22 = arith.addf %21, %20 : vector<128x128xf32>
    %23 = arith.divf %21, %22 : vector<128x128xf32>
    %24 = arith.mulf %18, %23 : vector<128x128xf32>
    %25 = vector.broadcast %0 : vector<128x1xf32> to vector<128x128xf32>
    %26 = arith.mulf %24, %25 : vector<128x128xf32>
    %c0_18 = arith.constant 0 : index
    %c0_19 = arith.constant 0 : index
    %27 = vector.load %arg13[%c0_18, %c0_19] : memref<128x128xf32, #tpu.memory_space<vmem>>, vector<128x128xf32>
    %cst_20 = arith.constant dense<0.000000e+00> : vector<128x128xf32>
    %28 = tpu.matmul %26, %27, %cst_20 {dimension_numbers = #tpu.dot_dimension_numbers<[1], [0], [0], [1], [0, 0, 1, 1], [], []>} : vector<128x128xf32>, vector<128x128xf32>, vector<128x128xf32> -> vector<128x128xf32>
    %c0_21 = arith.constant 0 : index
    %c0_22 = arith.constant 0 : index
    %29 = vector.load %arg14[%c0_21, %c0_22] : memref<1x128xf32, #tpu.memory_space<vmem>>, vector<1x128xf32>
    %30 = vector.broadcast %29 : vector<1x128xf32> to vector<128x128xf32>
    %31 = arith.addf %28, %30 : vector<128x128xf32>
    %c0_23 = arith.constant 0 : index
    %c0_24 = arith.constant 0 : index
    %32 = vector.load %arg15[%c0_23, %c0_24] : memref<128x128xf32, #tpu.memory_space<vmem>>, vector<128x128xf32>
    tpu.vector_store %arg15[%c0_23, %c0_24], %31 {strides = array<i32>} : memref<128x128xf32, #tpu.memory_space<vmem>>, vector<128x128xf32>,
    return
  }
  func.func @transform_0(%arg0: i32) -> (i32, i32) {
    %c0_i32 = arith.constant 0 : i32
    %c0_i32_0 = arith.constant 0 : i32
    %c0_i32_1 = arith.constant 0 : i32
    return %c0_i32, %c0_i32_0 : i32, i32
  }
  func.func @transform_1(%arg0: i32) -> (i32, i32) {
    %c0_i32 = arith.constant 0 : i32
    %c0_i32_0 = arith.constant 0 : i32
    %c0_i32_1 = arith.constant 0 : i32
    return %c0_i32, %c0_i32_0 : i32, i32
  }
  func.func @transform_2(%arg0: i32) -> (i32, i32) {
    %c0_i32 = arith.constant 0 : i32
    %c0_i32_0 = arith.constant 0 : i32
    %c0_i32_1 = arith.constant 0 : i32
    return %c0_i32, %c0_i32_0 : i32, i32
  }
  func.func @transform_3(%arg0: i32) -> (i32, i32) {
    %c0_i32 = arith.constant 0 : i32
    %c0_i32_0 = arith.constant 0 : i32
    %c0_i32_1 = arith.constant 0 : i32
    return %c0_i32, %c0_i32_0 : i32, i32
  }
  func.func @transform_4(%arg0: i32) -> (i32, i32) {
    %c0_i32 = arith.constant 0 : i32
    %c0_i32_0 = arith.constant 0 : i32
    %c0_i32_1 = arith.constant 0 : i32
    return %c0_i32, %c0_i32_0 : i32, i32
  }
  func.func @transform_5(%arg0: i32) -> (i32, i32) {
    %c0_i32 = arith.constant 0 : i32
    %c0_i32_0 = arith.constant 0 : i32
    %c0_i32_1 = arith.constant 0 : i32
    return %c0_i32, %c0_i32_0 : i32, i32
  }
  func.func @transform_6(%arg0: i32) -> (i32, i32) {
    %c0_i32 = arith.constant 0 : i32
    %c0_i32_0 = arith.constant 0 : i32
    %c0_i32_1 = arith.constant 0 : i32
    return %c0_i32, %c0_i32_0 : i32, i32
  }
  func.func @transform_7(%arg0: i32) -> (i32, i32, i32) {
    %c0_i32 = arith.constant 0 : i32
    %c0_i32_0 = arith.constant 0 : i32
    %c0_i32_1 = arith.constant 0 : i32
    %c0_i32_2 = arith.constant 0 : i32
    return %c0_i32, %c0_i32_0, %c0_i32_1 : i32, i32, i32
  }
  func.func @transform_8(%arg0: i32) -> (i32, i32, i32) {
    %c0_i32 = arith.constant 0 : i32
    %c0_i32_0 = arith.constant 0 : i32
    %c0_i32_1 = arith.constant 0 : i32
    %c0_i32_2 = arith.constant 0 : i32
    return %c0_i32, %c0_i32_0, %c0_i32_1 : i32, i32, i32
  }
  func.func @transform_9(%arg0: i32) -> (i32, i32, i32) {
    %c0_i32 = arith.constant 0 : i32
    %c0_i32_0 = arith.constant 0 : i32
    %c0_i32_1 = arith.constant 0 : i32
    %c0_i32_2 = arith.constant 0 : i32
    return %c0_i32, %c0_i32_0, %c0_i32_1 : i32, i32, i32
  }
  func.func @transform_10(%arg0: i32) -> (i32, i32) {
    %c0_i32 = arith.constant 0 : i32
    %c0_i32_0 = arith.constant 0 : i32
    %c0_i32_1 = arith.constant 0 : i32
    return %c0_i32, %c0_i32_0 : i32, i32
  }
  func.func @transform_11(%arg0: i32) -> (i32, i32) {
    %c0_i32 = arith.constant 0 : i32
    %c0_i32_0 = arith.constant 0 : i32
    %c0_i32_1 = arith.constant 0 : i32
    return %c0_i32, %c0_i32_0 : i32, i32
  }
  func.func @transform_12(%arg0: i32) -> (i32, i32) {
    %c0_i32 = arith.constant 0 : i32
    %c0_i32_0 = arith.constant 0 : i32
    %c0_i32_1 = arith.constant 0 : i32
    return %c0_i32, %c0_i32_0 : i32, i32
  }
  func.func @transform_13(%arg0: i32) -> (i32, i32) {
    %c0_i32 = arith.constant 0 : i32
    %c0_i32_0 = arith.constant 0 : i32
    %c0_i32_1 = arith.constant 0 : i32
    return %c0_i32, %c0_i32_0 : i32, i32
  }
  func.func @transform_14(%arg0: i32) -> (i32, i32) {
    %c0_i32 = arith.constant 0 : i32
    %c0_i32_0 = arith.constant 0 : i32
    %c0_i32_1 = arith.constant 0 : i32
    return %c0_i32, %c0_i32_0 : i32, i32
  }
}

</mosaic_0001>

<llo_original>
// kernel: seconv_model_forward.1
$region0: #{seconv_model_forward.1}
  #allocation0 [shape = 'u32[]', space=smem, size = 0x4, offset = 0x4, fixed_abs, tag = 'smem constant byte address 0x4 - core index']
  #allocation1 [shape = 'u32[144,128]{1,0:T(1,128)}', space=vmem, size = 0x12000, scoped, tag = 'internal scratch']
  #allocation2 [shape = 'f32[128,128]{1,0:T(8,128)}', space=vmem, size = 0x10000, scoped, tag = 'scratch operand']
  %s0 = inlined_call_operand.vmem [shape: f32[128,128], index: 0, kind: input, shape index: {}]
  %s1 = inlined_call_operand.vmem [shape: f32[128,1], index: 1, kind: input, shape index: {}]
  %s2 = inlined_call_operand.vmem [shape: f32[128,1], index: 2, kind: input, shape index: {}]
  %s3 = inlined_call_operand.hbm [shape: f32[128,128], index: 3, kind: input, shape index: {}]
  %s4 = inlined_call_operand.vmem [shape: f32[128,128], index: 4, kind: input, shape index: {}]
  %s5 = inlined_call_operand.vmem [shape: f32[128,128], index: 5, kind: input, shape index: {}]
  %s6 = inlined_call_operand.vmem [shape: f32[1,128], index: 6, kind: input, shape index: {}]
  %s7 = inlined_call_operand.vmem [shape: f32[2,128,128], index: 7, kind: input, shape index: {}]
  %s8 = inlined_call_operand.vmem [shape: f32[2,128,128], index: 8, kind: input, shape index: {}]
  %s9 = inlined_call_operand.vmem [shape: f32[2,128,128], index: 9, kind: input, shape index: {}]
  %s10 = inlined_call_operand.vmem [shape: f32[128,128], index: 10, kind: input, shape index: {}]
  %s11 = inlined_call_operand.vmem [shape: f32[1,128], index: 11, kind: input, shape index: {}]
  %s12 = inlined_call_operand.vmem [shape: f32[128,128], index: 12, kind: input, shape index: {}]
  %s13 = inlined_call_operand.vmem [shape: f32[1,128], index: 13, kind: input, shape index: {}]
  %s14 = inlined_call_operand.vmem [shape: f32[128,128], index: 14, kind: output, shape index: {}]
  %s15 = sld [smem:[#allocation0]]
  $region77: #{seconv_model_forward.1} parent=0
    _
  %s17 = ssub.s32 1, %s15
  %s18 = scalar_select 0, %s17, %s15
  $region1: #{seconv_model_forward.1} parent=0
    #allocation3 [shape = 'u8[65536]{0}', space=vmem, size = 0x10000, scoped, tag = 'input window, operand 3, single buffered']
    #allocation4 [shape = 's32[1]{0}', space=sflag, size = 0x4, scoped, tag = 'scoped memory for seconv_model_forward.1']
    %19 = vsyncpa [#allocation4], 0
    // Predicated region
    $region2: #{seconv_model_forward.1} parent=1 // pred_check
      _
    $region3: #{seconv_model_forward.1} parent=1 // pred_check_branch
      %21 = sbr.rel (0) target = $region5
    $region4: #{seconv_model_forward.1} parent=1 // pred_region
      _
    $region5: #{seconv_model_forward.1} parent=1 // pred_fallthru
      _
    // Predicated region
    $region6: #{seconv_model_forward.1} parent=1 // pred_check
      _
    $region7: #{seconv_model_forward.1} parent=1 // pred_check_branch
      %23 = sbr.rel (0) target = $region9
    $region8: #{seconv_model_forward.1} parent=1 // pred_region
      _
    $region9: #{seconv_model_forward.1} parent=1 // pred_fallthru
      _
    // Predicated region
    $region10: #{seconv_model_forward.1} parent=1 // pred_check
      _
    $region11: #{seconv_model_forward.1} parent=1 // pred_check_branch
      %25 = sbr.rel (0) target = $region13
    $region12: #{seconv_model_forward.1} parent=1 // pred_region
      _
    $region13: #{seconv_model_forward.1} parent=1 // pred_fallthru
      _
    // Predicated region
    $region14: #{seconv_model_forward.1} parent=1 // pred_check
      _
    $region15: #{seconv_model_forward.1} parent=1 // pred_check_branch
      %27 = sbr.rel (0) target = $region17
    $region16: #{seconv_model_forward.1} parent=1 // pred_region
      %s29 = ssub.s32 2048, 2048
      %30 = vsyncadd [#allocation4], %s29
      %s31 = sshll.u32 [#allocation3], 4
      %s32 = int_to_ptr.vmem [resolvable:$true] %s31
      %37 = dma.hbm_to_vmem [thread:$0]  %s3, 2048, %s32, [#allocation4], 128, 128, 8
    $region17: #{seconv_model_forward.1} parent=1 // pred_fallthru
      _
    // Predicated region
    $region18: #{seconv_model_forward.1} parent=1 // pred_check
      _
    $region19: #{seconv_model_forward.1} parent=1 // pred_check_branch
      %39 = sbr.rel (0) target = $region21
    $region20: #{seconv_model_forward.1} parent=1 // pred_region
      _
    $region21: #{seconv_model_forward.1} parent=1 // pred_fallthru
      _
    // Predicated region
    $region22: #{seconv_model_forward.1} parent=1 // pred_check
      _
    $region23: #{seconv_model_forward.1} parent=1 // pred_check_branch
      %41 = sbr.rel (0) target = $region25
    $region24: #{seconv_model_forward.1} parent=1 // pred_region
      _
    $region25: #{seconv_model_forward.1} parent=1 // pred_fallthru
      _
    // Predicated region
    $region26: #{seconv_model_forward.1} parent=1 // pred_check
      _
    $region27: #{seconv_model_forward.1} parent=1 // pred_check_branch
      %43 = sbr.rel (0) target = $region29
    $region28: #{seconv_model_forward.1} parent=1 // pred_region
      _
    $region29: #{seconv_model_forward.1} parent=1 // pred_fallthru
      _
    // Predicated region
    $region30: #{seconv_model_forward.1} parent=1 // pred_check
      _
    $region31: #{seconv_model_forward.1} parent=1 // pred_check_branch
      %45 = sbr.rel (0) target = $region33
    $region32: #{seconv_model_forward.1} parent=1 // pred_region
      _
    $region33: #{seconv_model_forward.1} parent=1 // pred_fallthru
      _
    // Predicated region
    $region34: #{seconv_model_forward.1} parent=1 // pred_check
      _
    $region35: #{seconv_model_forward.1} parent=1 // pred_check_branch
      %47 = sbr.rel (0) target = $region37
    $region36: #{seconv_model_forward.1} parent=1 // pred_region
      _
    $region37: #{seconv_model_forward.1} parent=1 // pred_fallthru
      _
    // Predicated region
    $region38: #{seconv_model_forward.1} parent=1 // pred_check
      _
    $region39: #{seconv_model_forward.1} parent=1 // pred_check_branch
      %49 = sbr.rel (0) target = $region41
    $region40: #{seconv_model_forward.1} parent=1 // pred_region
      _
    $region41: #{seconv_model_forward.1} parent=1 // pred_fallthru
      _
    // Predicated region
    $region42: #{seconv_model_forward.1} parent=1 // pred_check
      _
    $region43: #{seconv_model_forward.1} parent=1 // pred_check_branch
      %51 = sbr.rel (0) target = $region45
    $region44: #{seconv_model_forward.1} parent=1 // pred_region
      _
    $region45: #{seconv_model_forward.1} parent=1 // pred_fallthru
      _
    // Predicated region
    $region46: #{seconv_model_forward.1} parent=1 // pred_check
      _
    $region47: #{seconv_model_forward.1} parent=1 // pred_check_branch
      %53 = sbr.rel (0) target = $region49
    $region48: #{seconv_model_forward.1} parent=1 // pred_region
      _
    $region49: #{seconv_model_forward.1} parent=1 // pred_fallthru
      _
    // Predicated region
    $region50: #{seconv_model_forward.1} parent=1 // pred_check
      _
    $region51: #{seconv_model_forward.1} parent=1 // pred_check_branch
      %55 = sbr.rel (0) target = $region53
    $region52: #{seconv_model_forward.1} parent=1 // pred_region
      _
    $region53: #{seconv_model_forward.1} parent=1 // pred_fallthru
      _
    // Predicated region
    $region54: #{seconv_model_forward.1} parent=1 // pred_check
      _
    $region55: #{seconv_model_forward.1} parent=1 // pred_check_branch
      %57 = sbr.rel (0) target = $region57
    $region56: #{seconv_model_forward.1} parent=1 // pred_region
      _
    $region57: #{seconv_model_forward.1} parent=1 // pred_fallthru
      _
    // Predicated region
    $region58: #{seconv_model_forward.1} parent=1 // pred_check
      _
    $region59: #{seconv_model_forward.1} parent=1 // pred_check_branch
      %59 = sbr.rel (0) target = $region61
    $region60: #{seconv_model_forward.1} parent=1 // pred_region
      %60 = dma.done [#allocation4], 2048
    $region61: #{seconv_model_forward.1} parent=1 // pred_fallthru
      _
    %v61 = vld [vmem:[%s1] sm:$0xff]
    %v62 = vld [vmem:[%s1 + $0x8] sm:$0xff]
    %v63 = vld [vmem:[%s1 + $0x10] sm:$0xff]
    %v64 = vld [vmem:[%s1 + $0x18] sm:$0xff]
    %v65 = vld [vmem:[%s1 + $0x20] sm:$0xff]
    %v66 = vld [vmem:[%s1 + $0x28] sm:$0xff]
    %v67 = vld [vmem:[%s1 + $0x30] sm:$0xff]
    %v68 = vld [vmem:[%s1 + $0x38] sm:$0xff]
    %v69 = vld [vmem:[%s1 + $0x40] sm:$0xff]
    %v70 = vld [vmem:[%s1 + $0x48] sm:$0xff]
    %v71 = vld [vmem:[%s1 + $0x50] sm:$0xff]
    %v72 = vld [vmem:[%s1 + $0x58] sm:$0xff]
    %v73 = vld [vmem:[%s1 + $0x60] sm:$0xff]
    %v74 = vld [vmem:[%s1 + $0x68] sm:$0xff]
    %v75 = vld [vmem:[%s1 + $0x70] sm:$0xff]
    %v76 = vld [vmem:[%s1 + $0x78] sm:$0xff]
    %v77 = vld [vmem:[%s0] sm:$0xff]
    %v78 = vld [vmem:[%s0 + $0x8] sm:$0xff]
    %v79 = vld [vmem:[%s0 + $0x10] sm:$0xff]
    %v80 = vld [vmem:[%s0 + $0x18] sm:$0xff]
    %v81 = vld [vmem:[%s0 + $0x20] sm:$0xff]
    %v82 = vld [vmem:[%s0 + $0x28] sm:$0xff]
    %v83 = vld [vmem:[%s0 + $0x30] sm:$0xff]
    %v84 = vld [vmem:[%s0 + $0x38] sm:$0xff]
    %v85 = vld [vmem:[%s0 + $0x40] sm:$0xff]
    %v86 = vld [vmem:[%s0 + $0x48] sm:$0xff]
    %v87 = vld [vmem:[%s0 + $0x50] sm:$0xff]
    %v88 = vld [vmem:[%s0 + $0x58] sm:$0xff]
    %v89 = vld [vmem:[%s0 + $0x60] sm:$0xff]
    %v90 = vld [vmem:[%s0 + $0x68] sm:$0xff]
    %v91 = vld [vmem:[%s0 + $0x70] sm:$0xff]
    %v92 = vld [vmem:[%s0 + $0x78] sm:$0xff]
    %94 = vset.pattern.permute.xlu0 0
    %95 = vperm.xlu0 %94, %v61
    %v96 = vpop.permute.xlu0 %95
    %99 = vset.pattern.permute.xlu0 0
    %100 = vperm.xlu0 %99, %v62
    %v101 = vpop.permute.xlu0 %100
    %104 = vset.pattern.permute.xlu0 0
    %105 = vperm.xlu0 %104, %v63
    %v106 = vpop.permute.xlu0 %105
    %109 = vset.pattern.permute.xlu0 0
    %110 = vperm.xlu0 %109, %v64
    %v111 = vpop.permute.xlu0 %110
    %114 = vset.pattern.permute.xlu0 0
    %115 = vperm.xlu0 %114, %v65
    %v116 = vpop.permute.xlu0 %115
    %119 = vset.pattern.permute.xlu0 0
    %120 = vperm.xlu0 %119, %v66
    %v121 = vpop.permute.xlu0 %120
    %124 = vset.pattern.permute.xlu0 0
    %125 = vperm.xlu0 %124, %v67
    %v126 = vpop.permute.xlu0 %125
    %129 = vset.pattern.permute.xlu0 0
    %130 = vperm.xlu0 %129, %v68
    %v131 = vpop.permute.xlu0 %130
    %134 = vset.pattern.permute.xlu0 0
    %135 = vperm.xlu0 %134, %v69
    %v136 = vpop.permute.xlu0 %135
    %139 = vset.pattern.permute.xlu0 0
    %140 = vperm.xlu0 %139, %v70
    %v141 = vpop.permute.xlu0 %140
    %144 = vset.pattern.permute.xlu0 0
    %145 = vperm.xlu0 %144, %v71
    %v146 = vpop.permute.xlu0 %145
    %149 = vset.pattern.permute.xlu0 0
    %150 = vperm.xlu0 %149, %v72
    %v151 = vpop.permute.xlu0 %150
    %154 = vset.pattern.permute.xlu0 0
    %155 = vperm.xlu0 %154, %v73
    %v156 = vpop.permute.xlu0 %155
    %159 = vset.pattern.permute.xlu0 0
    %160 = vperm.xlu0 %159, %v74
    %v161 = vpop.permute.xlu0 %160
    %164 = vset.pattern.permute.xlu0 0
    %165 = vperm.xlu0 %164, %v75
    %v166 = vpop.permute.xlu0 %165
    %169 = vset.pattern.permute.xlu0 0
    %170 = vperm.xlu0 %169, %v76
    %v171 = vpop.permute.xlu0 %170
    %v173 = vmul.f32 %v77, %v96
    %v174 = vmul.f32 %v78, %v101
    %v175 = vmul.f32 %v79, %v106
    %v176 = vmul.f32 %v80, %v111
    %v177 = vmul.f32 %v81, %v116
    %v178 = vmul.f32 %v82, %v121
    %v179 = vmul.f32 %v83, %v126
    %v180 = vmul.f32 %v84, %v131
    %v181 = vmul.f32 %v85, %v136
    %v182 = vmul.f32 %v86, %v141
    %v183 = vmul.f32 %v87, %v146
    %v184 = vmul.f32 %v88, %v151
    %v185 = vmul.f32 %v89, %v156
    %v186 = vmul.f32 %v90, %v161
    %v187 = vmul.f32 %v91, %v166
    %v188 = vmul.f32 %v92, %v171
    %v189 = vld [vmem:[%s5] sm:$0xff]
    %v190 = vld [vmem:[%s5 + $0x8] sm:$0xff]
    %v191 = vld [vmem:[%s5 + $0x10] sm:$0xff]
    %v192 = vld [vmem:[%s5 + $0x18] sm:$0xff]
    %v193 = vld [vmem:[%s5 + $0x20] sm:$0xff]
    %v194 = vld [vmem:[%s5 + $0x28] sm:$0xff]
    %v195 = vld [vmem:[%s5 + $0x30] sm:$0xff]
    %v196 = vld [vmem:[%s5 + $0x38] sm:$0xff]
    %v197 = vld [vmem:[%s5 + $0x40] sm:$0xff]
    %v198 = vld [vmem:[%s5 + $0x48] sm:$0xff]
    %v199 = vld [vmem:[%s5 + $0x50] sm:$0xff]
    %v200 = vld [vmem:[%s5 + $0x58] sm:$0xff]
    %v201 = vld [vmem:[%s5 + $0x60] sm:$0xff]
    %v202 = vld [vmem:[%s5 + $0x68] sm:$0xff]
    %v203 = vld [vmem:[%s5 + $0x70] sm:$0xff]
    %v204 = vld [vmem:[%s5 + $0x78] sm:$0xff]
    %v205 = vld [vmem:[%s6] sm:$0x1]
    %v207 = vlaneseq
    %v208 = vshrl.u32 %v207, 7
    %v209 = vsub.s32 0, %v208
    %v210 = vrot.slane %v205, %v209
    %212 = vmatprep.subr.mxu0 0.0
    %213 = vmatpush1.msra.mxu0 %v204
    %214 = vmatprep.subr.mxu0 0.0
    %215 = vmatpush1.msra.mxu0 %v203
    %216 = vmatprep.subr.mxu0 0.0
    %217 = vmatpush1.msra.mxu0 %v202
    %218 = vmatprep.subr.mxu0 0.0
    %219 = vmatpush1.msra.mxu0 %v201
    %220 = vmatprep.subr.mxu0 0.0
    %221 = vmatpush1.msra.mxu0 %v200
    %222 = vmatprep.subr.mxu0 0.0
    %223 = vmatpush1.msra.mxu0 %v199
    %224 = vmatprep.subr.mxu0 0.0
    %225 = vmatpush1.msra.mxu0 %v198
    %226 = vmatprep.subr.mxu0 0.0
    %227 = vmatpush1.msra.mxu0 %v197
    %228 = vmatprep.subr.mxu0 0.0
    %229 = vmatpush1.msra.mxu0 %v196
    %230 = vmatprep.subr.mxu0 0.0
    %231 = vmatpush1.msra.mxu0 %v195
    %232 = vmatprep.subr.mxu0 0.0
    %233 = vmatpush1.msra.mxu0 %v194
    %234 = vmatprep.subr.mxu0 0.0
    %235 = vmatpush1.msra.mxu0 %v193
    %236 = vmatprep.subr.mxu0 0.0
    %237 = vmatpush1.msra.mxu0 %v192
    %238 = vmatprep.subr.mxu0 0.0
    %239 = vmatpush1.msra.mxu0 %v191
    %240 = vmatprep.subr.mxu0 0.0
    %241 = vmatpush1.msra.mxu0 %v190
    %242 = vmatprep.subr.mxu0 0.0
    %243 = vmatpush1.msra.mxu0 %v189
    %244 = vmatprep.subr.mxu0 0.0
    %245 = vmatpush2.msra.mxu0 0.0
    %246 = vmatprep.subr.mxu0 0.0
    %247 = vmatpush2.msra.mxu0 0.0
    %248 = vmatprep.subr.mxu0 0.0
    %249 = vmatpush2.msra.mxu0 0.0
    %250 = vmatprep.subr.mxu0 0.0
    %251 = vmatpush2.msra.mxu0 0.0
    %252 = vmatprep.subr.mxu0 0.0
    %253 = vmatpush2.msra.mxu0 0.0
    %254 = vmatprep.subr.mxu0 0.0
    %255 = vmatpush2.msra.mxu0 0.0
    %256 = vmatprep.subr.mxu0 0.0
    %257 = vmatpush2.msra.mxu0 0.0
    %258 = vmatprep.subr.mxu0 0.0
    %259 = vmatpush2.msra.mxu0 0.0
    %260 = vmatprep.subr.mxu0 0.0
    %261 = vmatpush2.msra.mxu0 0.0
    %262 = vmatprep.subr.mxu0 0.0
    %263 = vmatpush2.msra.mxu0 0.0
    %264 = vmatprep.subr.mxu0 0.0
    %265 = vmatpush2.msra.mxu0 0.0
    %266 = vmatprep.subr.mxu0 0.0
    %267 = vmatpush2.msra.mxu0 0.0
    %268 = vmatprep.subr.mxu0 0.0
    %269 = vmatpush2.msra.mxu0 0.0
    %270 = vmatprep.subr.mxu0 0.0
    %271 = vmatpush2.msra.mxu0 0.0
    %272 = vmatprep.subr.mxu0 0.0
    %273 = vmatpush2.msra.mxu0 0.0
    %274 = vmatprep.subr.mxu0 0.0
    %275 = vmatpush2.msra.mxu0 0.0
    %276 = vmatprep.mubr.f32.mxu0 0.0
    %277 = vmatmul.mubr.f32.gmra.mxu0 %v173
    %v278 = vpop.f32.mrf.mxu0
    %v279 = vadd.f32 %v210, %v278
    %v280 = vpop.f32.mrf.mxu0
    %281 = vmatprep.mubr.f32.mxu0 0.0
    %282 = vmatmul.mubr.f32.gmra.mxu0 %v174
    %v283 = vpop.f32.mrf.mxu0
    %v284 = vadd.f32 %v210, %v283
    %v285 = vpop.f32.mrf.mxu0
    %286 = vmatprep.mubr.f32.mxu0 0.0
    %287 = vmatmul.mubr.f32.gmra.mxu0 %v175
    %v288 = vpop.f32.mrf.mxu0
    %v289 = vadd.f32 %v210, %v288
    %v290 = vpop.f32.mrf.mxu0
    %291 = vmatprep.mubr.f32.mxu0 0.0
    %292 = vmatmul.mubr.f32.gmra.mxu0 %v176
    %v293 = vpop.f32.mrf.mxu0
    %v294 = vadd.f32 %v210, %v293
    %v295 = vpop.f32.mrf.mxu0
    %296 = vmatprep.mubr.f32.mxu0 0.0
    %297 = vmatmul.mubr.f32.gmra.mxu0 %v177
    %v298 = vpop.f32.mrf.mxu0
    %v299 = vadd.f32 %v210, %v298
    %v300 = vpop.f32.mrf.mxu0
    %301 = vmatprep.mubr.f32.mxu0 0.0
    %302 = vmatmul.mubr.f32.gmra.mxu0 %v178
    %v303 = vpop.f32.mrf.mxu0
    %v304 = vadd.f32 %v210, %v303
    %v305 = vpop.f32.mrf.mxu0
    %306 = vmatprep.mubr.f32.mxu0 0.0
    %307 = vmatmul.mubr.f32.gmra.mxu0 %v179
    %v308 = vpop.f32.mrf.mxu0
    %v309 = vadd.f32 %v210, %v308
    %v310 = vpop.f32.mrf.mxu0
    %311 = vmatprep.mubr.f32.mxu0 0.0
    %312 = vmatmul.mubr.f32.gmra.mxu0 %v180
    %v313 = vpop.f32.mrf.mxu0
    %v314 = vadd.f32 %v210, %v313
    %v315 = vpop.f32.mrf.mxu0
    %316 = vmatprep.mubr.f32.mxu0 0.0
    %317 = vmatmul.mubr.f32.gmra.mxu0 %v181
    %v318 = vpop.f32.mrf.mxu0
    %v319 = vadd.f32 %v210, %v318
    %v320 = vpop.f32.mrf.mxu0
    %321 = vmatprep.mubr.f32.mxu0 0.0
    %322 = vmatmul.mubr.f32.gmra.mxu0 %v182
    %v323 = vpop.f32.mrf.mxu0
    %v324 = vadd.f32 %v210, %v323
    %v325 = vpop.f32.mrf.mxu0
    %326 = vmatprep.mubr.f32.mxu0 0.0
    %327 = vmatmul.mubr.f32.gmra.mxu0 %v183
    %v328 = vpop.f32.mrf.mxu0
    %v329 = vadd.f32 %v210, %v328
    %v330 = vpop.f32.mrf.mxu0
    %331 = vmatprep.mubr.f32.mxu0 0.0
    %332 = vmatmul.mubr.f32.gmra.mxu0 %v184
    %v333 = vpop.f32.mrf.mxu0
    %v334 = vadd.f32 %v210, %v333
    %v335 = vpop.f32.mrf.mxu0
    %336 = vmatprep.mubr.f32.mxu0 0.0
    %337 = vmatmul.mubr.f32.gmra.mxu0 %v185
    %v338 = vpop.f32.mrf.mxu0
    %v339 = vadd.f32 %v210, %v338
    %v340 = vpop.f32.mrf.mxu0
    %341 = vmatprep.mubr.f32.mxu0 0.0
    %342 = vmatmul.mubr.f32.gmra.mxu0 %v186
    %v343 = vpop.f32.mrf.mxu0
    %v344 = vadd.f32 %v210, %v343
    %v345 = vpop.f32.mrf.mxu0
    %346 = vmatprep.mubr.f32.mxu0 0.0
    %347 = vmatmul.mubr.f32.gmra.mxu0 %v187
    %v348 = vpop.f32.mrf.mxu0
    %v349 = vadd.f32 %v210, %v348
    %v350 = vpop.f32.mrf.mxu0
    %351 = vmatprep.mubr.f32.mxu0 0.0
    %352 = vmatmul.mubr.f32.gmra.mxu0 %v188
    %v353 = vpop.f32.mrf.mxu0
    %v354 = vadd.f32 %v210, %v353
    %v355 = vpop.f32.mrf.mxu0
    %356 = vdwg.mxu0
    %357 = vst [vmem:[#allocation2] sm:$0xff] %v279
    %358 = vst [vmem:[#allocation2 + $0x8] sm:$0xff] %v284
    %359 = vst [vmem:[#allocation2 + $0x10] sm:$0xff] %v289
    %360 = vst [vmem:[#allocation2 + $0x18] sm:$0xff] %v294
    %361 = vst [vmem:[#allocation2 + $0x20] sm:$0xff] %v299
    %362 = vst [vmem:[#allocation2 + $0x28] sm:$0xff] %v304
    %363 = vst [vmem:[#allocation2 + $0x30] sm:$0xff] %v309
    %364 = vst [vmem:[#allocation2 + $0x38] sm:$0xff] %v314
    %365 = vst [vmem:[#allocation2 + $0x40] sm:$0xff] %v319
    %366 = vst [vmem:[#allocation2 + $0x48] sm:$0xff] %v324
    %367 = vst [vmem:[#allocation2 + $0x50] sm:$0xff] %v329
    %368 = vst [vmem:[#allocation2 + $0x58] sm:$0xff] %v334
    %369 = vst [vmem:[#allocation2 + $0x60] sm:$0xff] %v339
    %370 = vst [vmem:[#allocation2 + $0x68] sm:$0xff] %v344
    %371 = vst [vmem:[#allocation2 + $0x70] sm:$0xff] %v349
    %372 = vst [vmem:[#allocation2 + $0x78] sm:$0xff] %v354
    loop: start=0, step=1, limit=2
    $region62: #{seconv_model_forward.1} parent=1 // loop_pre_header
      _
    $region63: #{seconv_model_forward.1} parent=1 // loop_header
      %s374 = sphi 0, %s378
      %p375 = scmp.ge.s32.totalorder %s374, 2
    $region64: #{seconv_model_forward.1} parent=1 // loop_header_branch
      %377 = sbr.rel (%p375) target = $region68
    $region65: #{seconv_model_forward.1} parent=1 // loop_body
      %v379 = vld [vmem:[#allocation2] sm:$0xff]
      %v380 = vld [vmem:[#allocation2 + $0x8] sm:$0xff]
      %v381 = vld [vmem:[#allocation2 + $0x10] sm:$0xff]
      %v382 = vld [vmem:[#allocation2 + $0x18] sm:$0xff]
      %v383 = vld [vmem:[#allocation2 + $0x20] sm:$0xff]
      %v384 = vld [vmem:[#allocation2 + $0x28] sm:$0xff]
      %v385 = vld [vmem:[#allocation2 + $0x30] sm:$0xff]
      %v386 = vld [vmem:[#allocation2 + $0x38] sm:$0xff]
      %v387 = vld [vmem:[#allocation2 + $0x40] sm:$0xff]
      %v388 = vld [vmem:[#allocation2 + $0x48] sm:$0xff]
      %v389 = vld [vmem:[#allocation2 + $0x50] sm:$0xff]
      %v390 = vld [vmem:[#allocation2 + $0x58] sm:$0xff]
      %v391 = vld [vmem:[#allocation2 + $0x60] sm:$0xff]
      %v392 = vld [vmem:[#allocation2 + $0x68] sm:$0xff]
      %v393 = vld [vmem:[#allocation2 + $0x70] sm:$0xff]
      %v394 = vld [vmem:[#allocation2 + $0x78] sm:$0xff]
      %v395 = vld [vmem:[#allocation3] sm:$0xff]
      %v396 = vld [vmem:[#allocation3 + $0x8] sm:$0xff]
      %v397 = vld [vmem:[#allocation3 + $0x10] sm:$0xff]
      %v398 = vld [vmem:[#allocation3 + $0x18] sm:$0xff]
      %v399 = vld [vmem:[#allocation3 + $0x20] sm:$0xff]
      %v400 = vld [vmem:[#allocation3 + $0x28] sm:$0xff]
      %v401 = vld [vmem:[#allocation3 + $0x30] sm:$0xff]
      %v402 = vld [vmem:[#allocation3 + $0x38] sm:$0xff]
      %v403 = vld [vmem:[#allocation3 + $0x40] sm:$0xff]
      %v404 = vld [vmem:[#allocation3 + $0x48] sm:$0xff]
      %v405 = vld [vmem:[#allocation3 + $0x50] sm:$0xff]
      %v406 = vld [vmem:[#allocation3 + $0x58] sm:$0xff]
      %v407 = vld [vmem:[#allocation3 + $0x60] sm:$0xff]
      %v408 = vld [vmem:[#allocation3 + $0x68] sm:$0xff]
      %v409 = vld [vmem:[#allocation3 + $0x70] sm:$0xff]
      %v410 = vld [vmem:[#allocation3 + $0x78] sm:$0xff]
      %411 = vmatprep.subr.mxu0 0.0
      %412 = vmatpush1.msra.mxu0 %v394
      %413 = vmatprep.subr.mxu0 0.0
      %414 = vmatpush1.msra.mxu0 %v393
      %415 = vmatprep.subr.mxu0 0.0
      %416 = vmatpush1.msra.mxu0 %v392
      %417 = vmatprep.subr.mxu0 0.0
      %418 = vmatpush1.msra.mxu0 %v391
      %419 = vmatprep.subr.mxu0 0.0
      %420 = vmatpush1.msra.mxu0 %v390
      %421 = vmatprep.subr.mxu0 0.0
      %422 = vmatpush1.msra.mxu0 %v389
      %423 = vmatprep.subr.mxu0 0.0
      %424 = vmatpush1.msra.mxu0 %v388
      %425 = vmatprep.subr.mxu0 0.0
      %426 = vmatpush1.msra.mxu0 %v387
      %427 = vmatprep.subr.mxu0 0.0
      %428 = vmatpush1.msra.mxu0 %v386
      %429 = vmatprep.subr.mxu0 0.0
      %430 = vmatpush1.msra.mxu0 %v385
      %431 = vmatprep.subr.mxu0 0.0
      %432 = vmatpush1.msra.mxu0 %v384
      %433 = vmatprep.subr.mxu0 0.0
      %434 = vmatpush1.msra.mxu0 %v383
      %435 = vmatprep.subr.mxu0 0.0
      %436 = vmatpush1.msra.mxu0 %v382
      %437 = vmatprep.subr.mxu0 0.0
      %438 = vmatpush1.msra.mxu0 %v381
      %439 = vmatprep.subr.mxu0 0.0
      %440 = vmatpush1.msra.mxu0 %v380
      %441 = vmatprep.subr.mxu0 0.0
      %442 = vmatpush1.msra.mxu0 %v379
      %443 = vmatprep.subr.mxu0 0.0
      %444 = vmatpush2.msra.mxu0 0.0
      %445 = vmatprep.subr.mxu0 0.0
      %446 = vmatpush2.msra.mxu0 0.0
      %447 = vmatprep.subr.mxu0 0.0
      %448 = vmatpush2.msra.mxu0 0.0
      %449 = vmatprep.subr.mxu0 0.0
      %450 = vmatpush2.msra.mxu0 0.0
      %451 = vmatprep.subr.mxu0 0.0
      %452 = vmatpush2.msra.mxu0 0.0
      %453 = vmatprep.subr.mxu0 0.0
      %454 = vmatpush2.msra.mxu0 0.0
      %455 = vmatprep.subr.mxu0 0.0
      %456 = vmatpush2.msra.mxu0 0.0
      %457 = vmatprep.subr.mxu0 0.0
      %458 = vmatpush2.msra.mxu0 0.0
      %459 = vmatprep.subr.mxu0 0.0
      %460 = vmatpush2.msra.mxu0 0.0
      %461 = vmatprep.subr.mxu0 0.0
      %462 = vmatpush2.msra.mxu0 0.0
      %463 = vmatprep.subr.mxu0 0.0
      %464 = vmatpush2.msra.mxu0 0.0
      %465 = vmatprep.subr.mxu0 0.0
      %466 = vmatpush2.msra.mxu0 0.0
      %467 = vmatprep.subr.mxu0 0.0
      %468 = vmatpush2.msra.mxu0 0.0
      %469 = vmatprep.subr.mxu0 0.0
      %470 = vmatpush2.msra.mxu0 0.0
      %471 = vmatprep.subr.mxu0 0.0
      %472 = vmatpush2.msra.mxu0 0.0
      %473 = vmatprep.subr.mxu0 0.0
      %474 = vmatpush2.msra.mxu0 0.0
      %475 = vmatprep.mubr.f32.mxu0 0.0
      %476 = vmatmul.mubr.f32.gmra.mxu0 %v395
      %v477 = vpop.f32.mrf.mxu0
      %v478 = vadd.f32 0.0, %v477
      %v479 = vpop.f32.mrf.mxu0
      %480 = vmatprep.mubr.f32.mxu0 0.0
      %481 = vmatmul.mubr.f32.gmra.mxu0 %v396
      %v482 = vpop.f32.mrf.mxu0
      %v483 = vadd.f32 0.0, %v482
      %v484 = vpop.f32.mrf.mxu0
      %485 = vmatprep.mubr.f32.mxu0 0.0
      %486 = vmatmul.mubr.f32.gmra.mxu0 %v397
      %v487 = vpop.f32.mrf.mxu0
      %v488 = vadd.f32 0.0, %v487
      %v489 = vpop.f32.mrf.mxu0
      %490 = vmatprep.mubr.f32.mxu0 0.0
      %491 = vmatmul.mubr.f32.gmra.mxu0 %v398
      %v492 = vpop.f32.mrf.mxu0
      %v493 = vadd.f32 0.0, %v492
      %v494 = vpop.f32.mrf.mxu0
      %495 = vmatprep.mubr.f32.mxu0 0.0
      %496 = vmatmul.mubr.f32.gmra.mxu0 %v399
      %v497 = vpop.f32.mrf.mxu0
      %v498 = vadd.f32 0.0, %v497
      %v499 = vpop.f32.mrf.mxu0
      %500 = vmatprep.mubr.f32.mxu0 0.0
      %501 = vmatmul.mubr.f32.gmra.mxu0 %v400
      %v502 = vpop.f32.mrf.mxu0
      %v503 = vadd.f32 0.0, %v502
      %v504 = vpop.f32.mrf.mxu0
      %505 = vmatprep.mubr.f32.mxu0 0.0
      %506 = vmatmul.mubr.f32.gmra.mxu0 %v401
      %v507 = vpop.f32.mrf.mxu0
      %v508 = vadd.f32 0.0, %v507
      %v509 = vpop.f32.mrf.mxu0
      %510 = vmatprep.mubr.f32.mxu0 0.0
      %511 = vmatmul.mubr.f32.gmra.mxu0 %v402
      %v512 = vpop.f32.mrf.mxu0
      %v513 = vadd.f32 0.0, %v512
      %v514 = vpop.f32.mrf.mxu0
      %515 = vmatprep.mubr.f32.mxu0 0.0
      %516 = vmatmul.mubr.f32.gmra.mxu0 %v403
      %v517 = vpop.f32.mrf.mxu0
      %v518 = vadd.f32 0.0, %v517
      %v519 = vpop.f32.mrf.mxu0
      %520 = vmatprep.mubr.f32.mxu0 0.0
      %521 = vmatmul.mubr.f32.gmra.mxu0 %v404
      %v522 = vpop.f32.mrf.mxu0
      %v523 = vadd.f32 0.0, %v522
      %v524 = vpop.f32.mrf.mxu0
      %525 = vmatprep.mubr.f32.mxu0 0.0
      %526 = vmatmul.mubr.f32.gmra.mxu0 %v405
      %v527 = vpop.f32.mrf.mxu0
      %v528 = vadd.f32 0.0, %v527
      %v529 = vpop.f32.mrf.mxu0
      %530 = vmatprep.mubr.f32.mxu0 0.0
      %531 = vmatmul.mubr.f32.gmra.mxu0 %v406
      %v532 = vpop.f32.mrf.mxu0
      %v533 = vadd.f32 0.0, %v532
      %v534 = vpop.f32.mrf.mxu0
      %535 = vmatprep.mubr.f32.mxu0 0.0
      %536 = vmatmul.mubr.f32.gmra.mxu0 %v407
      %v537 = vpop.f32.mrf.mxu0
      %v538 = vadd.f32 0.0, %v537
      %v539 = vpop.f32.mrf.mxu0
      %540 = vmatprep.mubr.f32.mxu0 0.0
      %541 = vmatmul.mubr.f32.gmra.mxu0 %v408
      %v542 = vpop.f32.mrf.mxu0
      %v543 = vadd.f32 0.0, %v542
      %v544 = vpop.f32.mrf.mxu0
      %545 = vmatprep.mubr.f32.mxu0 0.0
      %546 = vmatmul.mubr.f32.gmra.mxu0 %v409
      %v547 = vpop.f32.mrf.mxu0
      %v548 = vadd.f32 0.0, %v547
      %v549 = vpop.f32.mrf.mxu0
      %550 = vmatprep.mubr.f32.mxu0 0.0
      %551 = vmatmul.mubr.f32.gmra.mxu0 %v410
      %v552 = vpop.f32.mrf.mxu0
      %v553 = vadd.f32 0.0, %v552
      %v554 = vpop.f32.mrf.mxu0
      %555 = vdwg.mxu0
      %v556 = vld [vmem:[%s2] sm:$0xff]
      %v557 = vld [vmem:[%s2 + $0x8] sm:$0xff]
      %v558 = vld [vmem:[%s2 + $0x10] sm:$0xff]
      %v559 = vld [vmem:[%s2 + $0x18] sm:$0xff]
      %v560 = vld [vmem:[%s2 + $0x20] sm:$0xff]
      %v561 = vld [vmem:[%s2 + $0x28] sm:$0xff]
      %v562 = vld [vmem:[%s2 + $0x30] sm:$0xff]
      %v563 = vld [vmem:[%s2 + $0x38] sm:$0xff]
      %v564 = vld [vmem:[%s2 + $0x40] sm:$0xff]
      %v565 = vld [vmem:[%s2 + $0x48] sm:$0xff]
      %v566 = vld [vmem:[%s2 + $0x50] sm:$0xff]
      %v567 = vld [vmem:[%s2 + $0x58] sm:$0xff]
      %v568 = vld [vmem:[%s2 + $0x60] sm:$0xff]
      %v569 = vld [vmem:[%s2 + $0x68] sm:$0xff]
      %v570 = vld [vmem:[%s2 + $0x70] sm:$0xff]
      %v571 = vld [vmem:[%s2 + $0x78] sm:$0xff]
      %s572 = smul.u32 %s374, 128
      %s573 = scalar_lea.vmem %s7, %s572
      %v574 = vld [vmem:[%s573] sm:$0xff]
      %v575 = vld [vmem:[%s573 + $0x8] sm:$0xff]
      %v576 = vld [vmem:[%s573 + $0x10] sm:$0xff]
      %v577 = vld [vmem:[%s573 + $0x18] sm:$0xff]
      %v578 = vld [vmem:[%s573 + $0x20] sm:$0xff]
      %v579 = vld [vmem:[%s573 + $0x28] sm:$0xff]
      %v580 = vld [vmem:[%s573 + $0x30] sm:$0xff]
      %v581 = vld [vmem:[%s573 + $0x38] sm:$0xff]
      %v582 = vld [vmem:[%s573 + $0x40] sm:$0xff]
      %v583 = vld [vmem:[%s573 + $0x48] sm:$0xff]
      %v584 = vld [vmem:[%s573 + $0x50] sm:$0xff]
      %v585 = vld [vmem:[%s573 + $0x58] sm:$0xff]
      %v586 = vld [vmem:[%s573 + $0x60] sm:$0xff]
      %v587 = vld [vmem:[%s573 + $0x68] sm:$0xff]
      %v588 = vld [vmem:[%s573 + $0x70] sm:$0xff]
      %v589 = vld [vmem:[%s573 + $0x78] sm:$0xff]
      %590 = vmatprep.subr.mxu0 0.0
      %591 = vmatpush1.msra.mxu0 %v589
      %592 = vmatprep.subr.mxu0 0.0
      %593 = vmatpush1.msra.mxu0 %v588
      %594 = vmatprep.subr.mxu0 0.0
      %595 = vmatpush1.msra.mxu0 %v587
      %596 = vmatprep.subr.mxu0 0.0
      %597 = vmatpush1.msra.mxu0 %v586
      %598 = vmatprep.subr.mxu0 0.0
      %599 = vmatpush1.msra.mxu0 %v585
      %600 = vmatprep.subr.mxu0 0.0
      %601 = vmatpush1.msra.mxu0 %v584
      %602 = vmatprep.subr.mxu0 0.0
      %603 = vmatpush1.msra.mxu0 %v583
      %604 = vmatprep.subr.mxu0 0.0
      %605 = vmatpush1.msra.mxu0 %v582
      %606 = vmatprep.subr.mxu0 0.0
      %607 = vmatpush1.msra.mxu0 %v581
      %608 = vmatprep.subr.mxu0 0.0
      %609 = vmatpush1.msra.mxu0 %v580
      %610 = vmatprep.subr.mxu0 0.0
      %611 = vmatpush1.msra.mxu0 %v579
      %612 = vmatprep.subr.mxu0 0.0
      %613 = vmatpush1.msra.mxu0 %v578
      %614 = vmatprep.subr.mxu0 0.0
      %615 = vmatpush1.msra.mxu0 %v577
      %616 = vmatprep.subr.mxu0 0.0
      %617 = vmatpush1.msra.mxu0 %v576
      %618 = vmatprep.subr.mxu0 0.0
      %619 = vmatpush1.msra.mxu0 %v575
      %620 = vmatprep.subr.mxu0 0.0
      %621 = vmatpush1.msra.mxu0 %v574
      %622 = vmatprep.subr.mxu0 0.0
      %623 = vmatpush2.msra.mxu0 0.0
      %624 = vmatprep.subr.mxu0 0.0
      %625 = vmatpush2.msra.mxu0 0.0
      %626 = vmatprep.subr.mxu0 0.0
      %627 = vmatpush2.msra.mxu0 0.0
      %628 = vmatprep.subr.mxu0 0.0
      %629 = vmatpush2.msra.mxu0 0.0
      %630 = vmatprep.subr.mxu0 0.0
      %631 = vmatpush2.msra.mxu0 0.0
      %632 = vmatprep.subr.mxu0 0.0
      %633 = vmatpush2.msra.mxu0 0.0
      %634 = vmatprep.subr.mxu0 0.0
      %635 = vmatpush2.msra.mxu0 0.0
      %636 = vmatprep.subr.mxu0 0.0
      %637 = vmatpush2.msra.mxu0 0.0
      %638 = vmatprep.subr.mxu0 0.0
      %639 = vmatpush2.msra.mxu0 0.0
      %640 = vmatprep.subr.mxu0 0.0
      %641 = vmatpush2.msra.mxu0 0.0
      %642 = vmatprep.subr.mxu0 0.0
      %643 = vmatpush2.msra.mxu0 0.0
      %644 = vmatprep.subr.mxu0 0.0
      %645 = vmatpush2.msra.mxu0 0.0
      %646 = vmatprep.subr.mxu0 0.0
      %647 = vmatpush2.msra.mxu0 0.0
      %648 = vmatprep.subr.mxu0 0.0
      %649 = vmatpush2.msra.mxu0 0.0
      %650 = vmatprep.subr.mxu0 0.0
      %651 = vmatpush2.msra.mxu0 0.0
      %652 = vmatprep.subr.mxu0 0.0
      %653 = vmatpush2.msra.mxu0 0.0
      %654 = vmatprep.mubr.f32.mxu0 0.0
      %655 = vmatmul.mubr.f32.gmra.mxu0 %v379
      %v656 = vpop.f32.mrf.mxu0
      %v657 = vadd.f32 0.0, %v656
      %v658 = vpop.f32.mrf.mxu0
      %659 = vmatprep.mubr.f32.mxu0 0.0
      %660 = vmatmul.mubr.f32.gmra.mxu0 %v380
      %v661 = vpop.f32.mrf.mxu0
      %v662 = vadd.f32 0.0, %v661
      %v663 = vpop.f32.mrf.mxu0
      %664 = vmatprep.mubr.f32.mxu0 0.0
      %665 = vmatmul.mubr.f32.gmra.mxu0 %v381
      %v666 = vpop.f32.mrf.mxu0
      %v667 = vadd.f32 0.0, %v666
      %v668 = vpop.f32.mrf.mxu0
      %669 = vmatprep.mubr.f32.mxu0 0.0
      %670 = vmatmul.mubr.f32.gmra.mxu0 %v382
      %v671 = vpop.f32.mrf.mxu0
      %v672 = vadd.f32 0.0, %v671
      %v673 = vpop.f32.mrf.mxu0
      %674 = vmatprep.mubr.f32.mxu0 0.0
      %675 = vmatmul.mubr.f32.gmra.mxu0 %v383
      %v676 = vpop.f32.mrf.mxu0
      %v677 = vadd.f32 0.0, %v676
      %v678 = vpop.f32.mrf.mxu0
      %679 = vmatprep.mubr.f32.mxu0 0.0
      %680 = vmatmul.mubr.f32.gmra.mxu0 %v384
      %v681 = vpop.f32.mrf.mxu0
      %v682 = vadd.f32 0.0, %v681
      %v683 = vpop.f32.mrf.mxu0
      %684 = vmatprep.mubr.f32.mxu0 0.0
      %685 = vmatmul.mubr.f32.gmra.mxu0 %v385
      %v686 = vpop.f32.mrf.mxu0
      %v687 = vadd.f32 0.0, %v686
      %v688 = vpop.f32.mrf.mxu0
      %689 = vmatprep.mubr.f32.mxu0 0.0
      %690 = vmatmul.mubr.f32.gmra.mxu0 %v386
      %v691 = vpop.f32.mrf.mxu0
      %v692 = vadd.f32 0.0, %v691
      %v693 = vpop.f32.mrf.mxu0
      %694 = vmatprep.mubr.f32.mxu0 0.0
      %695 = vmatmul.mubr.f32.gmra.mxu0 %v387
      %v696 = vpop.f32.mrf.mxu0
      %v697 = vadd.f32 0.0, %v696
      %v698 = vpop.f32.mrf.mxu0
      %699 = vmatprep.mubr.f32.mxu0 0.0
      %700 = vmatmul.mubr.f32.gmra.mxu0 %v388
      %v701 = vpop.f32.mrf.mxu0
      %v702 = vadd.f32 0.0, %v701
      %v703 = vpop.f32.mrf.mxu0
      %704 = vmatprep.mubr.f32.mxu0 0.0
      %705 = vmatmul.mubr.f32.gmra.mxu0 %v389
      %v706 = vpop.f32.mrf.mxu0
      %v707 = vadd.f32 0.0, %v706
      %v708 = vpop.f32.mrf.mxu0
      %709 = vmatprep.mubr.f32.mxu0 0.0
      %710 = vmatmul.mubr.f32.gmra.mxu0 %v390
      %v711 = vpop.f32.mrf.mxu0
      %v712 = vadd.f32 0.0, %v711
      %v713 = vpop.f32.mrf.mxu0
      %714 = vmatprep.mubr.f32.mxu0 0.0
      %715 = vmatmul.mubr.f32.gmra.mxu0 %v391
      %v716 = vpop.f32.mrf.mxu0
      %v717 = vadd.f32 0.0, %v716
      %v718 = vpop.f32.mrf.mxu0
      %719 = vmatprep.mubr.f32.mxu0 0.0
      %720 = vmatmul.mubr.f32.gmra.mxu0 %v392
      %v721 = vpop.f32.mrf.mxu0
      %v722 = vadd.f32 0.0, %v721
      %v723 = vpop.f32.mrf.mxu0
      %724 = vmatprep.mubr.f32.mxu0 0.0
      %725 = vmatmul.mubr.f32.gmra.mxu0 %v393
      %v726 = vpop.f32.mrf.mxu0
      %v727 = vadd.f32 0.0, %v726
      %v728 = vpop.f32.mrf.mxu0
      %729 = vmatprep.mubr.f32.mxu0 0.0
      %730 = vmatmul.mubr.f32.gmra.mxu0 %v394
      %v731 = vpop.f32.mrf.mxu0
      %v732 = vadd.f32 0.0, %v731
      %v733 = vpop.f32.mrf.mxu0
      %734 = vdwg.mxu0
      %736 = vset.pattern.permute.xlu0 0
      %737 = vperm.xlu0 %736, %v556
      %v738 = vpop.permute.xlu0 %737
      %741 = vset.pattern.permute.xlu0 0
      %742 = vperm.xlu0 %741, %v557
      %v743 = vpop.permute.xlu0 %742
      %746 = vset.pattern.permute.xlu0 0
      %747 = vperm.xlu0 %746, %v558
      %v748 = vpop.permute.xlu0 %747
      %751 = vset.pattern.permute.xlu0 0
      %752 = vperm.xlu0 %751, %v559
      %v753 = vpop.permute.xlu0 %752
      %756 = vset.pattern.permute.xlu0 0
      %757 = vperm.xlu0 %756, %v560
      %v758 = vpop.permute.xlu0 %757
      %761 = vset.pattern.permute.xlu0 0
      %762 = vperm.xlu0 %761, %v561
      %v763 = vpop.permute.xlu0 %762
      %766 = vset.pattern.permute.xlu0 0
      %767 = vperm.xlu0 %766, %v562
      %v768 = vpop.permute.xlu0 %767
      %771 = vset.pattern.permute.xlu0 0
      %772 = vperm.xlu0 %771, %v563
      %v773 = vpop.permute.xlu0 %772
      %776 = vset.pattern.permute.xlu0 0
      %777 = vperm.xlu0 %776, %v564
      %v778 = vpop.permute.xlu0 %777
      %781 = vset.pattern.permute.xlu0 0
      %782 = vperm.xlu0 %781, %v565
      %v783 = vpop.permute.xlu0 %782
      %786 = vset.pattern.permute.xlu0 0
      %787 = vperm.xlu0 %786, %v566
      %v788 = vpop.permute.xlu0 %787
      %791 = vset.pattern.permute.xlu0 0
      %792 = vperm.xlu0 %791, %v567
      %v793 = vpop.permute.xlu0 %792
      %796 = vset.pattern.permute.xlu0 0
      %797 = vperm.xlu0 %796, %v568
      %v798 = vpop.permute.xlu0 %797
      %801 = vset.pattern.permute.xlu0 0
      %802 = vperm.xlu0 %801, %v569
      %v803 = vpop.permute.xlu0 %802
      %806 = vset.pattern.permute.xlu0 0
      %807 = vperm.xlu0 %806, %v570
      %v808 = vpop.permute.xlu0 %807
      %811 = vset.pattern.permute.xlu0 0
      %812 = vperm.xlu0 %811, %v571
      %v813 = vpop.permute.xlu0 %812
      %v815 = vmul.f32 %v738, %v657
      %v816 = vmul.f32 %v743, %v662
      %v817 = vmul.f32 %v748, %v667
      %v818 = vmul.f32 %v753, %v672
      %v819 = vmul.f32 %v758, %v677
      %v820 = vmul.f32 %v763, %v682
      %v821 = vmul.f32 %v768, %v687
      %v822 = vmul.f32 %v773, %v692
      %v823 = vmul.f32 %v778, %v697
      %v824 = vmul.f32 %v783, %v702
      %v825 = vmul.f32 %v788, %v707
      %v826 = vmul.f32 %v793, %v712
      %v827 = vmul.f32 %v798, %v717
      %v828 = vmul.f32 %v803, %v722
      %v829 = vmul.f32 %v808, %v727
      %v830 = vmul.f32 %v813, %v732
      %s831 = scalar_lea.vmem %s8, %s572
      %v832 = vld [vmem:[%s831] sm:$0xff]
      %v833 = vld [vmem:[%s831 + $0x8] sm:$0xff]
      %v834 = vld [vmem:[%s831 + $0x10] sm:$0xff]
      %v835 = vld [vmem:[%s831 + $0x18] sm:$0xff]
      %v836 = vld [vmem:[%s831 + $0x20] sm:$0xff]
      %v837 = vld [vmem:[%s831 + $0x28] sm:$0xff]
      %v838 = vld [vmem:[%s831 + $0x30] sm:$0xff]
      %v839 = vld [vmem:[%s831 + $0x38] sm:$0xff]
      %v840 = vld [vmem:[%s831 + $0x40] sm:$0xff]
      %v841 = vld [vmem:[%s831 + $0x48] sm:$0xff]
      %v842 = vld [vmem:[%s831 + $0x50] sm:$0xff]
      %v843 = vld [vmem:[%s831 + $0x58] sm:$0xff]
      %v844 = vld [vmem:[%s831 + $0x60] sm:$0xff]
      %v845 = vld [vmem:[%s831 + $0x68] sm:$0xff]
      %v846 = vld [vmem:[%s831 + $0x70] sm:$0xff]
      %v847 = vld [vmem:[%s831 + $0x78] sm:$0xff]
      %848 = vmatprep.subr.mxu0 0.0
      %849 = vmatpush1.msra.mxu0 %v847
      %850 = vmatprep.subr.mxu0 0.0
      %851 = vmatpush1.msra.mxu0 %v846
      %852 = vmatprep.subr.mxu0 0.0
      %853 = vmatpush1.msra.mxu0 %v845
      %854 = vmatprep.subr.mxu0 0.0
      %855 = vmatpush1.msra.mxu0 %v844
      %856 = vmatprep.subr.mxu0 0.0
      %857 = vmatpush1.msra.mxu0 %v843
      %858 = vmatprep.subr.mxu0 0.0
      %859 = vmatpush1.msra.mxu0 %v842
      %860 = vmatprep.subr.mxu0 0.0
      %861 = vmatpush1.msra.mxu0 %v841
      %862 = vmatprep.subr.mxu0 0.0
      %863 = vmatpush1.msra.mxu0 %v840
      %864 = vmatprep.subr.mxu0 0.0
      %865 = vmatpush1.msra.mxu0 %v839
      %866 = vmatprep.subr.mxu0 0.0
      %867 = vmatpush1.msra.mxu0 %v838
      %868 = vmatprep.subr.mxu0 0.0
      %869 = vmatpush1.msra.mxu0 %v837
      %870 = vmatprep.subr.mxu0 0.0
      %871 = vmatpush1.msra.mxu0 %v836
      %872 = vmatprep.subr.mxu0 0.0
      %873 = vmatpush1.msra.mxu0 %v835
      %874 = vmatprep.subr.mxu0 0.0
      %875 = vmatpush1.msra.mxu0 %v834
      %876 = vmatprep.subr.mxu0 0.0
      %877 = vmatpush1.msra.mxu0 %v833
      %878 = vmatprep.subr.mxu0 0.0
      %879 = vmatpush1.msra.mxu0 %v832
      %880 = vmatprep.subr.mxu0 0.0
      %881 = vmatpush2.msra.mxu0 0.0
      %882 = vmatprep.subr.mxu0 0.0
      %883 = vmatpush2.msra.mxu0 0.0
      %884 = vmatprep.subr.mxu0 0.0
      %885 = vmatpush2.msra.mxu0 0.0
      %886 = vmatprep.subr.mxu0 0.0
      %887 = vmatpush2.msra.mxu0 0.0
      %888 = vmatprep.subr.mxu0 0.0
      %889 = vmatpush2.msra.mxu0 0.0
      %890 = vmatprep.subr.mxu0 0.0
      %891 = vmatpush2.msra.mxu0 0.0
      %892 = vmatprep.subr.mxu0 0.0
      %893 = vmatpush2.msra.mxu0 0.0
      %894 = vmatprep.subr.mxu0 0.0
      %895 = vmatpush2.msra.mxu0 0.0
      %896 = vmatprep.subr.mxu0 0.0
      %897 = vmatpush2.msra.mxu0 0.0
      %898 = vmatprep.subr.mxu0 0.0
      %899 = vmatpush2.msra.mxu0 0.0
      %900 = vmatprep.subr.mxu0 0.0
      %901 = vmatpush2.msra.mxu0 0.0
      %902 = vmatprep.subr.mxu0 0.0
      %903 = vmatpush2.msra.mxu0 0.0
      %904 = vmatprep.subr.mxu0 0.0
      %905 = vmatpush2.msra.mxu0 0.0
      %906 = vmatprep.subr.mxu0 0.0
      %907 = vmatpush2.msra.mxu0 0.0
      %908 = vmatprep.subr.mxu0 0.0
      %909 = vmatpush2.msra.mxu0 0.0
      %910 = vmatprep.subr.mxu0 0.0
      %911 = vmatpush2.msra.mxu0 0.0
      %912 = vmatprep.mubr.f32.mxu0 0.0
      %913 = vmatmul.mubr.f32.gmra.mxu0 %v478
      %v914 = vpop.f32.mrf.mxu0
      %v915 = vadd.f32 0.0, %v914
      %v916 = vpop.f32.mrf.mxu0
      %917 = vmatprep.mubr.f32.mxu0 0.0
      %918 = vmatmul.mubr.f32.gmra.mxu0 %v483
      %v919 = vpop.f32.mrf.mxu0
      %v920 = vadd.f32 0.0, %v919
      %v921 = vpop.f32.mrf.mxu0
      %922 = vmatprep.mubr.f32.mxu0 0.0
      %923 = vmatmul.mubr.f32.gmra.mxu0 %v488
      %v924 = vpop.f32.mrf.mxu0
      %v925 = vadd.f32 0.0, %v924
      %v926 = vpop.f32.mrf.mxu0
      %927 = vmatprep.mubr.f32.mxu0 0.0
      %928 = vmatmul.mubr.f32.gmra.mxu0 %v493
      %v929 = vpop.f32.mrf.mxu0
      %v930 = vadd.f32 0.0, %v929
      %v931 = vpop.f32.mrf.mxu0
      %932 = vmatprep.mubr.f32.mxu0 0.0
      %933 = vmatmul.mubr.f32.gmra.mxu0 %v498
      %v934 = vpop.f32.mrf.mxu0
      %v935 = vadd.f32 0.0, %v934
      %v936 = vpop.f32.mrf.mxu0
      %937 = vmatprep.mubr.f32.mxu0 0.0
      %938 = vmatmul.mubr.f32.gmra.mxu0 %v503
      %v939 = vpop.f32.mrf.mxu0
      %v940 = vadd.f32 0.0, %v939
      %v941 = vpop.f32.mrf.mxu0
      %942 = vmatprep.mubr.f32.mxu0 0.0
      %943 = vmatmul.mubr.f32.gmra.mxu0 %v508
      %v944 = vpop.f32.mrf.mxu0
      %v945 = vadd.f32 0.0, %v944
      %v946 = vpop.f32.mrf.mxu0
      %947 = vmatprep.mubr.f32.mxu0 0.0
      %948 = vmatmul.mubr.f32.gmra.mxu0 %v513
      %v949 = vpop.f32.mrf.mxu0
      %v950 = vadd.f32 0.0, %v949
      %v951 = vpop.f32.mrf.mxu0
      %952 = vmatprep.mubr.f32.mxu0 0.0
      %953 = vmatmul.mubr.f32.gmra.mxu0 %v518
      %v954 = vpop.f32.mrf.mxu0
      %v955 = vadd.f32 0.0, %v954
      %v956 = vpop.f32.mrf.mxu0
      %957 = vmatprep.mubr.f32.mxu0 0.0
      %958 = vmatmul.mubr.f32.gmra.mxu0 %v523
      %v959 = vpop.f32.mrf.mxu0
      %v960 = vadd.f32 0.0, %v959
      %v961 = vpop.f32.mrf.mxu0
      %962 = vmatprep.mubr.f32.mxu0 0.0
      %963 = vmatmul.mubr.f32.gmra.mxu0 %v528
      %v964 = vpop.f32.mrf.mxu0
      %v965 = vadd.f32 0.0, %v964
      %v966 = vpop.f32.mrf.mxu0
      %967 = vmatprep.mubr.f32.mxu0 0.0
      %968 = vmatmul.mubr.f32.gmra.mxu0 %v533
      %v969 = vpop.f32.mrf.mxu0
      %v970 = vadd.f32 0.0, %v969
      %v971 = vpop.f32.mrf.mxu0
      %972 = vmatprep.mubr.f32.mxu0 0.0
      %973 = vmatmul.mubr.f32.gmra.mxu0 %v538
      %v974 = vpop.f32.mrf.mxu0
      %v975 = vadd.f32 0.0, %v974
      %v976 = vpop.f32.mrf.mxu0
      %977 = vmatprep.mubr.f32.mxu0 0.0
      %978 = vmatmul.mubr.f32.gmra.mxu0 %v543
      %v979 = vpop.f32.mrf.mxu0
      %v980 = vadd.f32 0.0, %v979
      %v981 = vpop.f32.mrf.mxu0
      %982 = vmatprep.mubr.f32.mxu0 0.0
      %983 = vmatmul.mubr.f32.gmra.mxu0 %v548
      %v984 = vpop.f32.mrf.mxu0
      %v985 = vadd.f32 0.0, %v984
      %v986 = vpop.f32.mrf.mxu0
      %987 = vmatprep.mubr.f32.mxu0 0.0
      %988 = vmatmul.mubr.f32.gmra.mxu0 %v553
      %v989 = vpop.f32.mrf.mxu0
      %v990 = vadd.f32 0.0, %v989
      %v991 = vpop.f32.mrf.mxu0
      %992 = vdwg.mxu0
      %v993 = vadd.f32 %v815, %v915
      %v994 = vadd.f32 %v816, %v920
      %v995 = vadd.f32 %v817, %v925
      %v996 = vadd.f32 %v818, %v930
      %v997 = vadd.f32 %v819, %v935
      %v998 = vadd.f32 %v820, %v940
      %v999 = vadd.f32 %v821, %v945
      %v1000 = vadd.f32 %v822, %v950
      %v1001 = vadd.f32 %v823, %v955
      %v1002 = vadd.f32 %v824, %v960
      %v1003 = vadd.f32 %v825, %v965
      %v1004 = vadd.f32 %v826, %v970
      %v1005 = vadd.f32 %v827, %v975
      %v1006 = vadd.f32 %v828, %v980
      %v1007 = vadd.f32 %v829, %v985
      %v1008 = vadd.f32 %v830, %v990
      %v1009 = vld [vmem:[%s4] sm:$0xff]
      %v1010 = vld [vmem:[%s4 + $0x8] sm:$0xff]
      %v1011 = vld [vmem:[%s4 + $0x10] sm:$0xff]
      %v1012 = vld [vmem:[%s4 + $0x18] sm:$0xff]
      %v1013 = vld [vmem:[%s4 + $0x20] sm:$0xff]
      %v1014 = vld [vmem:[%s4 + $0x28] sm:$0xff]
      %v1015 = vld [vmem:[%s4 + $0x30] sm:$0xff]
      %v1016 = vld [vmem:[%s4 + $0x38] sm:$0xff]
      %v1017 = vld [vmem:[%s4 + $0x40] sm:$0xff]
      %v1018 = vld [vmem:[%s4 + $0x48] sm:$0xff]
      %v1019 = vld [vmem:[%s4 + $0x50] sm:$0xff]
      %v1020 = vld [vmem:[%s4 + $0x58] sm:$0xff]
      %v1021 = vld [vmem:[%s4 + $0x60] sm:$0xff]
      %v1022 = vld [vmem:[%s4 + $0x68] sm:$0xff]
      %v1023 = vld [vmem:[%s4 + $0x70] sm:$0xff]
      %v1024 = vld [vmem:[%s4 + $0x78] sm:$0xff]
      %s1025 = scalar_lea.vmem %s9, %s572
      %v1026 = vld [vmem:[%s1025] sm:$0xff]
      %v1027 = vld [vmem:[%s1025 + $0x8] sm:$0xff]
      %v1028 = vld [vmem:[%s1025 + $0x10] sm:$0xff]
      %v1029 = vld [vmem:[%s1025 + $0x18] sm:$0xff]
      %v1030 = vld [vmem:[%s1025 + $0x20] sm:$0xff]
      %v1031 = vld [vmem:[%s1025 + $0x28] sm:$0xff]
      %v1032 = vld [vmem:[%s1025 + $0x30] sm:$0xff]
      %v1033 = vld [vmem:[%s1025 + $0x38] sm:$0xff]
      %v1034 = vld [vmem:[%s1025 + $0x40] sm:$0xff]
      %v1035 = vld [vmem:[%s1025 + $0x48] sm:$0xff]
      %v1036 = vld [vmem:[%s1025 + $0x50] sm:$0xff]
      %v1037 = vld [vmem:[%s1025 + $0x58] sm:$0xff]
      %v1038 = vld [vmem:[%s1025 + $0x60] sm:$0xff]
      %v1039 = vld [vmem:[%s1025 + $0x68] sm:$0xff]
      %v1040 = vld [vmem:[%s1025 + $0x70] sm:$0xff]
      %v1041 = vld [vmem:[%s1025 + $0x78] sm:$0xff]
      %1042 = vmatprep.subr.mxu0 0.0
      %1043 = vmatpush1.msra.mxu0 %v1041
      %1044 = vmatprep.subr.mxu0 0.0
      %1045 = vmatpush1.msra.mxu0 %v1040
      %1046 = vmatprep.subr.mxu0 0.0
      %1047 = vmatpush1.msra.mxu0 %v1039
      %1048 = vmatprep.subr.mxu0 0.0
      %1049 = vmatpush1.msra.mxu0 %v1038
      %1050 = vmatprep.subr.mxu0 0.0
      %1051 = vmatpush1.msra.mxu0 %v1037
      %1052 = vmatprep.subr.mxu0 0.0
      %1053 = vmatpush1.msra.mxu0 %v1036
      %1054 = vmatprep.subr.mxu0 0.0
      %1055 = vmatpush1.msra.mxu0 %v1035
      %1056 = vmatprep.subr.mxu0 0.0
      %1057 = vmatpush1.msra.mxu0 %v1034
      %1058 = vmatprep.subr.mxu0 0.0
      %1059 = vmatpush1.msra.mxu0 %v1033
      %1060 = vmatprep.subr.mxu0 0.0
      %1061 = vmatpush1.msra.mxu0 %v1032
      %1062 = vmatprep.subr.mxu0 0.0
      %1063 = vmatpush1.msra.mxu0 %v1031
      %1064 = vmatprep.subr.mxu0 0.0
      %1065 = vmatpush1.msra.mxu0 %v1030
      %1066 = vmatprep.subr.mxu0 0.0
      %1067 = vmatpush1.msra.mxu0 %v1029
      %1068 = vmatprep.subr.mxu0 0.0
      %1069 = vmatpush1.msra.mxu0 %v1028
      %1070 = vmatprep.subr.mxu0 0.0
      %1071 = vmatpush1.msra.mxu0 %v1027
      %1072 = vmatprep.subr.mxu0 0.0
      %1073 = vmatpush1.msra.mxu0 %v1026
      %1074 = vmatprep.subr.mxu0 0.0
      %1075 = vmatpush2.msra.mxu0 0.0
      %1076 = vmatprep.subr.mxu0 0.0
      %1077 = vmatpush2.msra.mxu0 0.0
      %1078 = vmatprep.subr.mxu0 0.0
      %1079 = vmatpush2.msra.mxu0 0.0
      %1080 = vmatprep.subr.mxu0 0.0
      %1081 = vmatpush2.msra.mxu0 0.0
      %1082 = vmatprep.subr.mxu0 0.0
      %1083 = vmatpush2.msra.mxu0 0.0
      %1084 = vmatprep.subr.mxu0 0.0
      %1085 = vmatpush2.msra.mxu0 0.0
      %1086 = vmatprep.subr.mxu0 0.0
      %1087 = vmatpush2.msra.mxu0 0.0
      %1088 = vmatprep.subr.mxu0 0.0
      %1089 = vmatpush2.msra.mxu0 0.0
      %1090 = vmatprep.subr.mxu0 0.0
      %1091 = vmatpush2.msra.mxu0 0.0
      %1092 = vmatprep.subr.mxu0 0.0
      %1093 = vmatpush2.msra.mxu0 0.0
      %1094 = vmatprep.subr.mxu0 0.0
      %1095 = vmatpush2.msra.mxu0 0.0
      %1096 = vmatprep.subr.mxu0 0.0
      %1097 = vmatpush2.msra.mxu0 0.0
      %1098 = vmatprep.subr.mxu0 0.0
      %1099 = vmatpush2.msra.mxu0 0.0
      %1100 = vmatprep.subr.mxu0 0.0
      %1101 = vmatpush2.msra.mxu0 0.0
      %1102 = vmatprep.subr.mxu0 0.0
      %1103 = vmatpush2.msra.mxu0 0.0
      %1104 = vmatprep.subr.mxu0 0.0
      %1105 = vmatpush2.msra.mxu0 0.0
      %1106 = vmatprep.mubr.f32.mxu0 0.0
      %1107 = vmatmul.mubr.f32.gmra.mxu0 %v1009
      %v1108 = vpop.f32.mrf.mxu0
      %v1109 = vadd.f32 0.0, %v1108
      %v1110 = vpop.f32.mrf.mxu0
      %1111 = vmatprep.mubr.f32.mxu0 0.0
      %1112 = vmatmul.mubr.f32.gmra.mxu0 %v1010
      %v1113 = vpop.f32.mrf.mxu0
      %v1114 = vadd.f32 0.0, %v1113
      %v1115 = vpop.f32.mrf.mxu0
      %1116 = vmatprep.mubr.f32.mxu0 0.0
      %1117 = vmatmul.mubr.f32.gmra.mxu0 %v1011
      %v1118 = vpop.f32.mrf.mxu0
      %v1119 = vadd.f32 0.0, %v1118
      %v1120 = vpop.f32.mrf.mxu0
      %1121 = vmatprep.mubr.f32.mxu0 0.0
      %1122 = vmatmul.mubr.f32.gmra.mxu0 %v1012
      %v1123 = vpop.f32.mrf.mxu0
      %v1124 = vadd.f32 0.0, %v1123
      %v1125 = vpop.f32.mrf.mxu0
      %1126 = vmatprep.mubr.f32.mxu0 0.0
      %1127 = vmatmul.mubr.f32.gmra.mxu0 %v1013
      %v1128 = vpop.f32.mrf.mxu0
      %v1129 = vadd.f32 0.0, %v1128
      %v1130 = vpop.f32.mrf.mxu0
      %1131 = vmatprep.mubr.f32.mxu0 0.0
      %1132 = vmatmul.mubr.f32.gmra.mxu0 %v1014
      %v1133 = vpop.f32.mrf.mxu0
      %v1134 = vadd.f32 0.0, %v1133
      %v1135 = vpop.f32.mrf.mxu0
      %1136 = vmatprep.mubr.f32.mxu0 0.0
      %1137 = vmatmul.mubr.f32.gmra.mxu0 %v1015
      %v1138 = vpop.f32.mrf.mxu0
      %v1139 = vadd.f32 0.0, %v1138
      %v1140 = vpop.f32.mrf.mxu0
      %1141 = vmatprep.mubr.f32.mxu0 0.0
      %1142 = vmatmul.mubr.f32.gmra.mxu0 %v1016
      %v1143 = vpop.f32.mrf.mxu0
      %v1144 = vadd.f32 0.0, %v1143
      %v1145 = vpop.f32.mrf.mxu0
      %1146 = vmatprep.mubr.f32.mxu0 0.0
      %1147 = vmatmul.mubr.f32.gmra.mxu0 %v1017
      %v1148 = vpop.f32.mrf.mxu0
      %v1149 = vadd.f32 0.0, %v1148
      %v1150 = vpop.f32.mrf.mxu0
      %1151 = vmatprep.mubr.f32.mxu0 0.0
      %1152 = vmatmul.mubr.f32.gmra.mxu0 %v1018
      %v1153 = vpop.f32.mrf.mxu0
      %v1154 = vadd.f32 0.0, %v1153
      %v1155 = vpop.f32.mrf.mxu0
      %1156 = vmatprep.mubr.f32.mxu0 0.0
      %1157 = vmatmul.mubr.f32.gmra.mxu0 %v1019
      %v1158 = vpop.f32.mrf.mxu0
      %v1159 = vadd.f32 0.0, %v1158
      %v1160 = vpop.f32.mrf.mxu0
      %1161 = vmatprep.mubr.f32.mxu0 0.0
      %1162 = vmatmul.mubr.f32.gmra.mxu0 %v1020
      %v1163 = vpop.f32.mrf.mxu0
      %v1164 = vadd.f32 0.0, %v1163
      %v1165 = vpop.f32.mrf.mxu0
      %1166 = vmatprep.mubr.f32.mxu0 0.0
      %1167 = vmatmul.mubr.f32.gmra.mxu0 %v1021
      %v1168 = vpop.f32.mrf.mxu0
      %v1169 = vadd.f32 0.0, %v1168
      %v1170 = vpop.f32.mrf.mxu0
      %1171 = vmatprep.mubr.f32.mxu0 0.0
      %1172 = vmatmul.mubr.f32.gmra.mxu0 %v1022
      %v1173 = vpop.f32.mrf.mxu0
      %v1174 = vadd.f32 0.0, %v1173
      %v1175 = vpop.f32.mrf.mxu0
      %1176 = vmatprep.mubr.f32.mxu0 0.0
      %1177 = vmatmul.mubr.f32.gmra.mxu0 %v1023
      %v1178 = vpop.f32.mrf.mxu0
      %v1179 = vadd.f32 0.0, %v1178
      %v1180 = vpop.f32.mrf.mxu0
      %1181 = vmatprep.mubr.f32.mxu0 0.0
      %1182 = vmatmul.mubr.f32.gmra.mxu0 %v1024
      %v1183 = vpop.f32.mrf.mxu0
      %v1184 = vadd.f32 0.0, %v1183
      %v1185 = vpop.f32.mrf.mxu0
      %1186 = vdwg.mxu0
      %v1187 = vadd.f32 %v993, %v1109
      %v1188 = vadd.f32 %v994, %v1114
      %v1189 = vadd.f32 %v995, %v1119
      %v1190 = vadd.f32 %v996, %v1124
      %v1191 = vadd.f32 %v997, %v1129
      %v1192 = vadd.f32 %v998, %v1134
      %v1193 = vadd.f32 %v999, %v1139
      %v1194 = vadd.f32 %v1000, %v1144
      %v1195 = vadd.f32 %v1001, %v1149
      %v1196 = vadd.f32 %v1002, %v1154
      %v1197 = vadd.f32 %v1003, %v1159
      %v1198 = vadd.f32 %v1004, %v1164
      %v1199 = vadd.f32 %v1005, %v1169
      %v1200 = vadd.f32 %v1006, %v1174
      %v1201 = vadd.f32 %v1007, %v1179
      %v1202 = vadd.f32 %v1008, %v1184
      %v1203 = vxor.u32 %v1187, 2147483648
      %v1204 = vxor.u32 %v1188, 2147483648
      %v1205 = vxor.u32 %v1189, 2147483648
      %v1206 = vxor.u32 %v1190, 2147483648
      %v1207 = vxor.u32 %v1191, 2147483648
      %v1208 = vxor.u32 %v1192, 2147483648
      %v1209 = vxor.u32 %v1193, 2147483648
      %v1210 = vxor.u32 %v1194, 2147483648
      %v1211 = vxor.u32 %v1195, 2147483648
      %v1212 = vxor.u32 %v1196, 2147483648
      %v1213 = vxor.u32 %v1197, 2147483648
      %v1214 = vxor.u32 %v1198, 2147483648
      %v1215 = vxor.u32 %v1199, 2147483648
      %v1216 = vxor.u32 %v1200, 2147483648
      %v1217 = vxor.u32 %v1201, 2147483648
      %v1218 = vxor.u32 %v1202, 2147483648
      %v1219 = vmul.f32 %v1203, 1.442695
      %v1220 = vpow.pop %v1219
      %v1221 = vmul.f32 %v1204, 1.442695
      %v1222 = vpow.pop %v1221
      %v1223 = vmul.f32 %v1205, 1.442695
      %v1224 = vpow.pop %v1223
      %v1225 = vmul.f32 %v1206, 1.442695
      %v1226 = vpow.pop %v1225
      %v1227 = vmul.f32 %v1207, 1.442695
      %v1228 = vpow.pop %v1227
      %v1229 = vmul.f32 %v1208, 1.442695
      %v1230 = vpow.pop %v1229
      %v1231 = vmul.f32 %v1209, 1.442695
      %v1232 = vpow.pop %v1231
      %v1233 = vmul.f32 %v1210, 1.442695
      %v1234 = vpow.pop %v1233
      %v1235 = vmul.f32 %v1211, 1.442695
      %v1236 = vpow.pop %v1235
      %v1237 = vmul.f32 %v1212, 1.442695
      %v1238 = vpow.pop %v1237
      %v1239 = vmul.f32 %v1213, 1.442695
      %v1240 = vpow.pop %v1239
      %v1241 = vmul.f32 %v1214, 1.442695
      %v1242 = vpow.pop %v1241
      %v1243 = vmul.f32 %v1215, 1.442695
      %v1244 = vpow.pop %v1243
      %v1245 = vmul.f32 %v1216, 1.442695
      %v1246 = vpow.pop %v1245
      %v1247 = vmul.f32 %v1217, 1.442695
      %v1248 = vpow.pop %v1247
      %v1249 = vmul.f32 %v1218, 1.442695
      %v1250 = vpow.pop %v1249
      %v1251 = vadd.f32 %v1220, 1.0
      %v1252 = vadd.f32 %v1222, 1.0
      %v1253 = vadd.f32 %v1224, 1.0
      %v1254 = vadd.f32 %v1226, 1.0
      %v1255 = vadd.f32 %v1228, 1.0
      %v1256 = vadd.f32 %v1230, 1.0
      %v1257 = vadd.f32 %v1232, 1.0
      %v1258 = vadd.f32 %v1234, 1.0
      %v1259 = vadd.f32 %v1236, 1.0
      %v1260 = vadd.f32 %v1238, 1.0
      %v1261 = vadd.f32 %v1240, 1.0
      %v1262 = vadd.f32 %v1242, 1.0
      %v1263 = vadd.f32 %v1244, 1.0
      %v1264 = vadd.f32 %v1246, 1.0
      %v1265 = vadd.f32 %v1248, 1.0
      %v1266 = vadd.f32 %v1250, 1.0
      %v1267 = vrcp.pop %v1251
      %v1268 = vmul.f32 1.0, %v1267
      %v1269 = vrcp.pop %v1252
      %v1270 = vmul.f32 1.0, %v1269
      %v1271 = vrcp.pop %v1253
      %v1272 = vmul.f32 1.0, %v1271
      %v1273 = vrcp.pop %v1254
      %v1274 = vmul.f32 1.0, %v1273
      %v1275 = vrcp.pop %v1255
      %v1276 = vmul.f32 1.0, %v1275
      %v1277 = vrcp.pop %v1256
      %v1278 = vmul.f32 1.0, %v1277
      %v1279 = vrcp.pop %v1257
      %v1280 = vmul.f32 1.0, %v1279
      %v1281 = vrcp.pop %v1258
      %v1282 = vmul.f32 1.0, %v1281
      %v1283 = vrcp.pop %v1259
      %v1284 = vmul.f32 1.0, %v1283
      %v1285 = vrcp.pop %v1260
      %v1286 = vmul.f32 1.0, %v1285
      %v1287 = vrcp.pop %v1261
      %v1288 = vmul.f32 1.0, %v1287
      %v1289 = vrcp.pop %v1262
      %v1290 = vmul.f32 1.0, %v1289
      %v1291 = vrcp.pop %v1263
      %v1292 = vmul.f32 1.0, %v1291
      %v1293 = vrcp.pop %v1264
      %v1294 = vmul.f32 1.0, %v1293
      %v1295 = vrcp.pop %v1265
      %v1296 = vmul.f32 1.0, %v1295
      %v1297 = vrcp.pop %v1266
      %v1298 = vmul.f32 1.0, %v1297
      %v1299 = vmul.f32 %v1187, %v1268
      %v1300 = vmul.f32 %v1188, %v1270
      %v1301 = vmul.f32 %v1189, %v1272
      %v1302 = vmul.f32 %v1190, %v1274
      %v1303 = vmul.f32 %v1191, %v1276
      %v1304 = vmul.f32 %v1192, %v1278
      %v1305 = vmul.f32 %v1193, %v1280
      %v1306 = vmul.f32 %v1194, %v1282
      %v1307 = vmul.f32 %v1195, %v1284
      %v1308 = vmul.f32 %v1196, %v1286
      %v1309 = vmul.f32 %v1197, %v1288
      %v1310 = vmul.f32 %v1198, %v1290
      %v1311 = vmul.f32 %v1199, %v1292
      %v1312 = vmul.f32 %v1200, %v1294
      %v1313 = vmul.f32 %v1201, %v1296
      %v1314 = vmul.f32 %v1202, %v1298
      %v1315 = vadd.f32 %v379, %v1299
      %v1316 = vadd.f32 %v380, %v1300
      %v1317 = vadd.f32 %v381, %v1301
      %v1318 = vadd.f32 %v382, %v1302
      %v1319 = vadd.f32 %v383, %v1303
      %v1320 = vadd.f32 %v384, %v1304
      %v1321 = vadd.f32 %v385, %v1305
      %v1322 = vadd.f32 %v386, %v1306
      %v1323 = vadd.f32 %v387, %v1307
      %v1324 = vadd.f32 %v388, %v1308
      %v1325 = vadd.f32 %v389, %v1309
      %v1326 = vadd.f32 %v390, %v1310
      %v1327 = vadd.f32 %v391, %v1311
      %v1328 = vadd.f32 %v392, %v1312
      %v1329 = vadd.f32 %v393, %v1313
      %v1330 = vadd.f32 %v394, %v1314
      %1331 = vst [vmem:[#allocation2] sm:$0xff] %v1315
      %1332 = vst [vmem:[#allocation2 + $0x8] sm:$0xff] %v1316
      %1333 = vst [vmem:[#allocation2 + $0x10] sm:$0xff] %v1317
      %1334 = vst [vmem:[#allocation2 + $0x18] sm:$0xff] %v1318
      %1335 = vst [vmem:[#allocation2 + $0x20] sm:$0xff] %v1319
      %1336 = vst [vmem:[#allocation2 + $0x28] sm:$0xff] %v1320
      %1337 = vst [vmem:[#allocation2 + $0x30] sm:$0xff] %v1321
      %1338 = vst [vmem:[#allocation2 + $0x38] sm:$0xff] %v1322
      %1339 = vst [vmem:[#allocation2 + $0x40] sm:$0xff] %v1323
      %1340 = vst [vmem:[#allocation2 + $0x48] sm:$0xff] %v1324
      %1341 = vst [vmem:[#allocation2 + $0x50] sm:$0xff] %v1325
      %1342 = vst [vmem:[#allocation2 + $0x58] sm:$0xff] %v1326
      %1343 = vst [vmem:[#allocation2 + $0x60] sm:$0xff] %v1327
      %1344 = vst [vmem:[#allocation2 + $0x68] sm:$0xff] %v1328
      %1345 = vst [vmem:[#allocation2 + $0x70] sm:$0xff] %v1329
      %1346 = vst [vmem:[#allocation2 + $0x78] sm:$0xff] %v1330
    $region66: #{seconv_model_forward.1} parent=1 // loop_footer
      %s378 = sadd.s32 1, %s374
    $region67: #{seconv_model_forward.1} parent=1 // loop_footer_branch
      %373 = sbr.rel target = $region63
    $region68: #{seconv_model_forward.1} parent=1 // loop_exit
      _
    %v1347 = vld [vmem:[#allocation2] sm:$0xff]
    %v1348 = vld [vmem:[#allocation2 + $0x8] sm:$0xff]
    %v1349 = vld [vmem:[#allocation2 + $0x10] sm:$0xff]
    %v1350 = vld [vmem:[#allocation2 + $0x18] sm:$0xff]
    %v1351 = vld [vmem:[#allocation2 + $0x20] sm:$0xff]
    %v1352 = vld [vmem:[#allocation2 + $0x28] sm:$0xff]
    %v1353 = vld [vmem:[#allocation2 + $0x30] sm:$0xff]
    %v1354 = vld [vmem:[#allocation2 + $0x38] sm:$0xff]
    %v1355 = vld [vmem:[#allocation2 + $0x40] sm:$0xff]
    %v1356 = vld [vmem:[#allocation2 + $0x48] sm:$0xff]
    %v1357 = vld [vmem:[#allocation2 + $0x50] sm:$0xff]
    %v1358 = vld [vmem:[#allocation2 + $0x58] sm:$0xff]
    %v1359 = vld [vmem:[#allocation2 + $0x60] sm:$0xff]
    %v1360 = vld [vmem:[#allocation2 + $0x68] sm:$0xff]
    %v1361 = vld [vmem:[#allocation2 + $0x70] sm:$0xff]
    %v1362 = vld [vmem:[#allocation2 + $0x78] sm:$0xff]
    %v1363 = vmul.f32 %v1347, %v96
    %v1364 = vmul.f32 %v1348, %v101
    %v1365 = vmul.f32 %v1349, %v106
    %v1366 = vmul.f32 %v1350, %v111
    %v1367 = vmul.f32 %v1351, %v116
    %v1368 = vmul.f32 %v1352, %v121
    %v1369 = vmul.f32 %v1353, %v126
    %v1370 = vmul.f32 %v1354, %v131
    %v1371 = vmul.f32 %v1355, %v136
    %v1372 = vmul.f32 %v1356, %v141
    %v1373 = vmul.f32 %v1357, %v146
    %v1374 = vmul.f32 %v1358, %v151
    %v1375 = vmul.f32 %v1359, %v156
    %v1376 = vmul.f32 %v1360, %v161
    %v1377 = vmul.f32 %v1361, %v166
    %v1378 = vmul.f32 %v1362, %v171
    %v1379 = vld [vmem:[%s10] sm:$0xff]
    %v1380 = vld [vmem:[%s10 + $0x8] sm:$0xff]
    %v1381 = vld [vmem:[%s10 + $0x10] sm:$0xff]
    %v1382 = vld [vmem:[%s10 + $0x18] sm:$0xff]
    %v1383 = vld [vmem:[%s10 + $0x20] sm:$0xff]
    %v1384 = vld [vmem:[%s10 + $0x28] sm:$0xff]
    %v1385 = vld [vmem:[%s10 + $0x30] sm:$0xff]
    %v1386 = vld [vmem:[%s10 + $0x38] sm:$0xff]
    %v1387 = vld [vmem:[%s10 + $0x40] sm:$0xff]
    %v1388 = vld [vmem:[%s10 + $0x48] sm:$0xff]
    %v1389 = vld [vmem:[%s10 + $0x50] sm:$0xff]
    %v1390 = vld [vmem:[%s10 + $0x58] sm:$0xff]
    %v1391 = vld [vmem:[%s10 + $0x60] sm:$0xff]
    %v1392 = vld [vmem:[%s10 + $0x68] sm:$0xff]
    %v1393 = vld [vmem:[%s10 + $0x70] sm:$0xff]
    %v1394 = vld [vmem:[%s10 + $0x78] sm:$0xff]
    %v1395 = vld [vmem:[%s11] sm:$0x1]
    %v1397 = vlaneseq
    %v1398 = vshrl.u32 %v1397, 7
    %v1399 = vsub.s32 0, %v1398
    %v1400 = vrot.slane %v1395, %v1399
    %1402 = vmatprep.subr.mxu0 0.0
    %1403 = vmatpush1.msra.mxu0 %v1394
    %1404 = vmatprep.subr.mxu0 0.0
    %1405 = vmatpush1.msra.mxu0 %v1393
    %1406 = vmatprep.subr.mxu0 0.0
    %1407 = vmatpush1.msra.mxu0 %v1392
    %1408 = vmatprep.subr.mxu0 0.0
    %1409 = vmatpush1.msra.mxu0 %v1391
    %1410 = vmatprep.subr.mxu0 0.0
    %1411 = vmatpush1.msra.mxu0 %v1390
    %1412 = vmatprep.subr.mxu0 0.0
    %1413 = vmatpush1.msra.mxu0 %v1389
    %1414 = vmatprep.subr.mxu0 0.0
    %1415 = vmatpush1.msra.mxu0 %v1388
    %1416 = vmatprep.subr.mxu0 0.0
    %1417 = vmatpush1.msra.mxu0 %v1387
    %1418 = vmatprep.subr.mxu0 0.0
    %1419 = vmatpush1.msra.mxu0 %v1386
    %1420 = vmatprep.subr.mxu0 0.0
    %1421 = vmatpush1.msra.mxu0 %v1385
    %1422 = vmatprep.subr.mxu0 0.0
    %1423 = vmatpush1.msra.mxu0 %v1384
    %1424 = vmatprep.subr.mxu0 0.0
    %1425 = vmatpush1.msra.mxu0 %v1383
    %1426 = vmatprep.subr.mxu0 0.0
    %1427 = vmatpush1.msra.mxu0 %v1382
    %1428 = vmatprep.subr.mxu0 0.0
    %1429 = vmatpush1.msra.mxu0 %v1381
    %1430 = vmatprep.subr.mxu0 0.0
    %1431 = vmatpush1.msra.mxu0 %v1380
    %1432 = vmatprep.subr.mxu0 0.0
    %1433 = vmatpush1.msra.mxu0 %v1379
    %1434 = vmatprep.subr.mxu0 0.0
    %1435 = vmatpush2.msra.mxu0 0.0
    %1436 = vmatprep.subr.mxu0 0.0
    %1437 = vmatpush2.msra.mxu0 0.0
    %1438 = vmatprep.subr.mxu0 0.0
    %1439 = vmatpush2.msra.mxu0 0.0
    %1440 = vmatprep.subr.mxu0 0.0
    %1441 = vmatpush2.msra.mxu0 0.0
    %1442 = vmatprep.subr.mxu0 0.0
    %1443 = vmatpush2.msra.mxu0 0.0
    %1444 = vmatprep.subr.mxu0 0.0
    %1445 = vmatpush2.msra.mxu0 0.0
    %1446 = vmatprep.subr.mxu0 0.0
    %1447 = vmatpush2.msra.mxu0 0.0
    %1448 = vmatprep.subr.mxu0 0.0
    %1449 = vmatpush2.msra.mxu0 0.0
    %1450 = vmatprep.subr.mxu0 0.0
    %1451 = vmatpush2.msra.mxu0 0.0
    %1452 = vmatprep.subr.mxu0 0.0
    %1453 = vmatpush2.msra.mxu0 0.0
    %1454 = vmatprep.subr.mxu0 0.0
    %1455 = vmatpush2.msra.mxu0 0.0
    %1456 = vmatprep.subr.mxu0 0.0
    %1457 = vmatpush2.msra.mxu0 0.0
    %1458 = vmatprep.subr.mxu0 0.0
    %1459 = vmatpush2.msra.mxu0 0.0
    %1460 = vmatprep.subr.mxu0 0.0
    %1461 = vmatpush2.msra.mxu0 0.0
    %1462 = vmatprep.subr.mxu0 0.0
    %1463 = vmatpush2.msra.mxu0 0.0
    %1464 = vmatprep.subr.mxu0 0.0
    %1465 = vmatpush2.msra.mxu0 0.0
    %1466 = vmatprep.mubr.f32.mxu0 0.0
    %1467 = vmatmul.mubr.f32.gmra.mxu0 %v1363
    %v1468 = vpop.f32.mrf.mxu0
    %v1469 = vadd.f32 %v1400, %v1468
    %v1470 = vpop.f32.mrf.mxu0
    %1471 = vmatprep.mubr.f32.mxu0 0.0
    %1472 = vmatmul.mubr.f32.gmra.mxu0 %v1364
    %v1473 = vpop.f32.mrf.mxu0
    %v1474 = vadd.f32 %v1400, %v1473
    %v1475 = vpop.f32.mrf.mxu0
    %1476 = vmatprep.mubr.f32.mxu0 0.0
    %1477 = vmatmul.mubr.f32.gmra.mxu0 %v1365
    %v1478 = vpop.f32.mrf.mxu0
    %v1479 = vadd.f32 %v1400, %v1478
    %v1480 = vpop.f32.mrf.mxu0
    %1481 = vmatprep.mubr.f32.mxu0 0.0
    %1482 = vmatmul.mubr.f32.gmra.mxu0 %v1366
    %v1483 = vpop.f32.mrf.mxu0
    %v1484 = vadd.f32 %v1400, %v1483
    %v1485 = vpop.f32.mrf.mxu0
    %1486 = vmatprep.mubr.f32.mxu0 0.0
    %1487 = vmatmul.mubr.f32.gmra.mxu0 %v1367
    %v1488 = vpop.f32.mrf.mxu0
    %v1489 = vadd.f32 %v1400, %v1488
    %v1490 = vpop.f32.mrf.mxu0
    %1491 = vmatprep.mubr.f32.mxu0 0.0
    %1492 = vmatmul.mubr.f32.gmra.mxu0 %v1368
    %v1493 = vpop.f32.mrf.mxu0
    %v1494 = vadd.f32 %v1400, %v1493
    %v1495 = vpop.f32.mrf.mxu0
    %1496 = vmatprep.mubr.f32.mxu0 0.0
    %1497 = vmatmul.mubr.f32.gmra.mxu0 %v1369
    %v1498 = vpop.f32.mrf.mxu0
    %v1499 = vadd.f32 %v1400, %v1498
    %v1500 = vpop.f32.mrf.mxu0
    %1501 = vmatprep.mubr.f32.mxu0 0.0
    %1502 = vmatmul.mubr.f32.gmra.mxu0 %v1370
    %v1503 = vpop.f32.mrf.mxu0
    %v1504 = vadd.f32 %v1400, %v1503
    %v1505 = vpop.f32.mrf.mxu0
    %1506 = vmatprep.mubr.f32.mxu0 0.0
    %1507 = vmatmul.mubr.f32.gmra.mxu0 %v1371
    %v1508 = vpop.f32.mrf.mxu0
    %v1509 = vadd.f32 %v1400, %v1508
    %v1510 = vpop.f32.mrf.mxu0
    %1511 = vmatprep.mubr.f32.mxu0 0.0
    %1512 = vmatmul.mubr.f32.gmra.mxu0 %v1372
    %v1513 = vpop.f32.mrf.mxu0
    %v1514 = vadd.f32 %v1400, %v1513
    %v1515 = vpop.f32.mrf.mxu0
    %1516 = vmatprep.mubr.f32.mxu0 0.0
    %1517 = vmatmul.mubr.f32.gmra.mxu0 %v1373
    %v1518 = vpop.f32.mrf.mxu0
    %v1519 = vadd.f32 %v1400, %v1518
    %v1520 = vpop.f32.mrf.mxu0
    %1521 = vmatprep.mubr.f32.mxu0 0.0
    %1522 = vmatmul.mubr.f32.gmra.mxu0 %v1374
    %v1523 = vpop.f32.mrf.mxu0
    %v1524 = vadd.f32 %v1400, %v1523
    %v1525 = vpop.f32.mrf.mxu0
    %1526 = vmatprep.mubr.f32.mxu0 0.0
    %1527 = vmatmul.mubr.f32.gmra.mxu0 %v1375
    %v1528 = vpop.f32.mrf.mxu0
    %v1529 = vadd.f32 %v1400, %v1528
    %v1530 = vpop.f32.mrf.mxu0
    %1531 = vmatprep.mubr.f32.mxu0 0.0
    %1532 = vmatmul.mubr.f32.gmra.mxu0 %v1376
    %v1533 = vpop.f32.mrf.mxu0
    %v1534 = vadd.f32 %v1400, %v1533
    %v1535 = vpop.f32.mrf.mxu0
    %1536 = vmatprep.mubr.f32.mxu0 0.0
    %1537 = vmatmul.mubr.f32.gmra.mxu0 %v1377
    %v1538 = vpop.f32.mrf.mxu0
    %v1539 = vadd.f32 %v1400, %v1538
    %v1540 = vpop.f32.mrf.mxu0
    %1541 = vmatprep.mubr.f32.mxu0 0.0
    %1542 = vmatmul.mubr.f32.gmra.mxu0 %v1378
    %v1543 = vpop.f32.mrf.mxu0
    %v1544 = vadd.f32 %v1400, %v1543
    %v1545 = vpop.f32.mrf.mxu0
    %1546 = vdwg.mxu0
    %v1547 = vxor.u32 %v1469, 2147483648
    %v1548 = vxor.u32 %v1474, 2147483648
    %v1549 = vxor.u32 %v1479, 2147483648
    %v1550 = vxor.u32 %v1484, 2147483648
    %v1551 = vxor.u32 %v1489, 2147483648
    %v1552 = vxor.u32 %v1494, 2147483648
    %v1553 = vxor.u32 %v1499, 2147483648
    %v1554 = vxor.u32 %v1504, 2147483648
    %v1555 = vxor.u32 %v1509, 2147483648
    %v1556 = vxor.u32 %v1514, 2147483648
    %v1557 = vxor.u32 %v1519, 2147483648
    %v1558 = vxor.u32 %v1524, 2147483648
    %v1559 = vxor.u32 %v1529, 2147483648
    %v1560 = vxor.u32 %v1534, 2147483648
    %v1561 = vxor.u32 %v1539, 2147483648
    %v1562 = vxor.u32 %v1544, 2147483648
    %v1563 = vmul.f32 %v1547, 1.442695
    %v1564 = vpow.pop %v1563
    %v1565 = vmul.f32 %v1548, 1.442695
    %v1566 = vpow.pop %v1565
    %v1567 = vmul.f32 %v1549, 1.442695
    %v1568 = vpow.pop %v1567
    %v1569 = vmul.f32 %v1550, 1.442695
    %v1570 = vpow.pop %v1569
    %v1571 = vmul.f32 %v1551, 1.442695
    %v1572 = vpow.pop %v1571
    %v1573 = vmul.f32 %v1552, 1.442695
    %v1574 = vpow.pop %v1573
    %v1575 = vmul.f32 %v1553, 1.442695
    %v1576 = vpow.pop %v1575
    %v1577 = vmul.f32 %v1554, 1.442695
    %v1578 = vpow.pop %v1577
    %v1579 = vmul.f32 %v1555, 1.442695
    %v1580 = vpow.pop %v1579
    %v1581 = vmul.f32 %v1556, 1.442695
    %v1582 = vpow.pop %v1581
    %v1583 = vmul.f32 %v1557, 1.442695
    %v1584 = vpow.pop %v1583
    %v1585 = vmul.f32 %v1558, 1.442695
    %v1586 = vpow.pop %v1585
    %v1587 = vmul.f32 %v1559, 1.442695
    %v1588 = vpow.pop %v1587
    %v1589 = vmul.f32 %v1560, 1.442695
    %v1590 = vpow.pop %v1589
    %v1591 = vmul.f32 %v1561, 1.442695
    %v1592 = vpow.pop %v1591
    %v1593 = vmul.f32 %v1562, 1.442695
    %v1594 = vpow.pop %v1593
    %v1595 = vadd.f32 %v1564, 1.0
    %v1596 = vadd.f32 %v1566, 1.0
    %v1597 = vadd.f32 %v1568, 1.0
    %v1598 = vadd.f32 %v1570, 1.0
    %v1599 = vadd.f32 %v1572, 1.0
    %v1600 = vadd.f32 %v1574, 1.0
    %v1601 = vadd.f32 %v1576, 1.0
    %v1602 = vadd.f32 %v1578, 1.0
    %v1603 = vadd.f32 %v1580, 1.0
    %v1604 = vadd.f32 %v1582, 1.0
    %v1605 = vadd.f32 %v1584, 1.0
    %v1606 = vadd.f32 %v1586, 1.0
    %v1607 = vadd.f32 %v1588, 1.0
    %v1608 = vadd.f32 %v1590, 1.0
    %v1609 = vadd.f32 %v1592, 1.0
    %v1610 = vadd.f32 %v1594, 1.0
    %v1611 = vrcp.pop %v1595
    %v1612 = vmul.f32 1.0, %v1611
    %v1613 = vrcp.pop %v1596
    %v1614 = vmul.f32 1.0, %v1613
    %v1615 = vrcp.pop %v1597
    %v1616 = vmul.f32 1.0, %v1615
    %v1617 = vrcp.pop %v1598
    %v1618 = vmul.f32 1.0, %v1617
    %v1619 = vrcp.pop %v1599
    %v1620 = vmul.f32 1.0, %v1619
    %v1621 = vrcp.pop %v1600
    %v1622 = vmul.f32 1.0, %v1621
    %v1623 = vrcp.pop %v1601
    %v1624 = vmul.f32 1.0, %v1623
    %v1625 = vrcp.pop %v1602
    %v1626 = vmul.f32 1.0, %v1625
    %v1627 = vrcp.pop %v1603
    %v1628 = vmul.f32 1.0, %v1627
    %v1629 = vrcp.pop %v1604
    %v1630 = vmul.f32 1.0, %v1629
    %v1631 = vrcp.pop %v1605
    %v1632 = vmul.f32 1.0, %v1631
    %v1633 = vrcp.pop %v1606
    %v1634 = vmul.f32 1.0, %v1633
    %v1635 = vrcp.pop %v1607
    %v1636 = vmul.f32 1.0, %v1635
    %v1637 = vrcp.pop %v1608
    %v1638 = vmul.f32 1.0, %v1637
    %v1639 = vrcp.pop %v1609
    %v1640 = vmul.f32 1.0, %v1639
    %v1641 = vrcp.pop %v1610
    %v1642 = vmul.f32 1.0, %v1641
    %v1643 = vmul.f32 %v1469, %v1612
    %v1644 = vmul.f32 %v1474, %v1614
    %v1645 = vmul.f32 %v1479, %v1616
    %v1646 = vmul.f32 %v1484, %v1618
    %v1647 = vmul.f32 %v1489, %v1620
    %v1648 = vmul.f32 %v1494, %v1622
    %v1649 = vmul.f32 %v1499, %v1624
    %v1650 = vmul.f32 %v1504, %v1626
    %v1651 = vmul.f32 %v1509, %v1628
    %v1652 = vmul.f32 %v1514, %v1630
    %v1653 = vmul.f32 %v1519, %v1632
    %v1654 = vmul.f32 %v1524, %v1634
    %v1655 = vmul.f32 %v1529, %v1636
    %v1656 = vmul.f32 %v1534, %v1638
    %v1657 = vmul.f32 %v1539, %v1640
    %v1658 = vmul.f32 %v1544, %v1642
    %v1659 = vmul.f32 %v1643, %v96
    %v1660 = vmul.f32 %v1644, %v101
    %v1661 = vmul.f32 %v1645, %v106
    %v1662 = vmul.f32 %v1646, %v111
    %v1663 = vmul.f32 %v1647, %v116
    %v1664 = vmul.f32 %v1648, %v121
    %v1665 = vmul.f32 %v1649, %v126
    %v1666 = vmul.f32 %v1650, %v131
    %v1667 = vmul.f32 %v1651, %v136
    %v1668 = vmul.f32 %v1652, %v141
    %v1669 = vmul.f32 %v1653, %v146
    %v1670 = vmul.f32 %v1654, %v151
    %v1671 = vmul.f32 %v1655, %v156
    %v1672 = vmul.f32 %v1656, %v161
    %v1673 = vmul.f32 %v1657, %v166
    %v1674 = vmul.f32 %v1658, %v171
    %v1675 = vld [vmem:[%s12] sm:$0xff]
    %v1676 = vld [vmem:[%s12 + $0x8] sm:$0xff]
    %v1677 = vld [vmem:[%s12 + $0x10] sm:$0xff]
    %v1678 = vld [vmem:[%s12 + $0x18] sm:$0xff]
    %v1679 = vld [vmem:[%s12 + $0x20] sm:$0xff]
    %v1680 = vld [vmem:[%s12 + $0x28] sm:$0xff]
    %v1681 = vld [vmem:[%s12 + $0x30] sm:$0xff]
    %v1682 = vld [vmem:[%s12 + $0x38] sm:$0xff]
    %v1683 = vld [vmem:[%s12 + $0x40] sm:$0xff]
    %v1684 = vld [vmem:[%s12 + $0x48] sm:$0xff]
    %v1685 = vld [vmem:[%s12 + $0x50] sm:$0xff]
    %v1686 = vld [vmem:[%s12 + $0x58] sm:$0xff]
    %v1687 = vld [vmem:[%s12 + $0x60] sm:$0xff]
    %v1688 = vld [vmem:[%s12 + $0x68] sm:$0xff]
    %v1689 = vld [vmem:[%s12 + $0x70] sm:$0xff]
    %v1690 = vld [vmem:[%s12 + $0x78] sm:$0xff]
    %v1691 = vld [vmem:[%s13] sm:$0x1]
    %v1693 = vlaneseq
    %v1694 = vshrl.u32 %v1693, 7
    %v1695 = vsub.s32 0, %v1694
    %v1696 = vrot.slane %v1691, %v1695
    %1698 = vmatprep.subr.mxu0 0.0
    %1699 = vmatpush1.msra.mxu0 %v1690
    %1700 = vmatprep.subr.mxu0 0.0
    %1701 = vmatpush1.msra.mxu0 %v1689
    %1702 = vmatprep.subr.mxu0 0.0
    %1703 = vmatpush1.msra.mxu0 %v1688
    %1704 = vmatprep.subr.mxu0 0.0
    %1705 = vmatpush1.msra.mxu0 %v1687
    %1706 = vmatprep.subr.mxu0 0.0
    %1707 = vmatpush1.msra.mxu0 %v1686
    %1708 = vmatprep.subr.mxu0 0.0
    %1709 = vmatpush1.msra.mxu0 %v1685
    %1710 = vmatprep.subr.mxu0 0.0
    %1711 = vmatpush1.msra.mxu0 %v1684
    %1712 = vmatprep.subr.mxu0 0.0
    %1713 = vmatpush1.msra.mxu0 %v1683
    %1714 = vmatprep.subr.mxu0 0.0
    %1715 = vmatpush1.msra.mxu0 %v1682
    %1716 = vmatprep.subr.mxu0 0.0
    %1717 = vmatpush1.msra.mxu0 %v1681
    %1718 = vmatprep.subr.mxu0 0.0
    %1719 = vmatpush1.msra.mxu0 %v1680
    %1720 = vmatprep.subr.mxu0 0.0
    %1721 = vmatpush1.msra.mxu0 %v1679
    %1722 = vmatprep.subr.mxu0 0.0
    %1723 = vmatpush1.msra.mxu0 %v1678
    %1724 = vmatprep.subr.mxu0 0.0
    %1725 = vmatpush1.msra.mxu0 %v1677
    %1726 = vmatprep.subr.mxu0 0.0
    %1727 = vmatpush1.msra.mxu0 %v1676
    %1728 = vmatprep.subr.mxu0 0.0
    %1729 = vmatpush1.msra.mxu0 %v1675
    %1730 = vmatprep.subr.mxu0 0.0
    %1731 = vmatpush2.msra.mxu0 0.0
    %1732 = vmatprep.subr.mxu0 0.0
    %1733 = vmatpush2.msra.mxu0 0.0
    %1734 = vmatprep.subr.mxu0 0.0
    %1735 = vmatpush2.msra.mxu0 0.0
    %1736 = vmatprep.subr.mxu0 0.0
    %1737 = vmatpush2.msra.mxu0 0.0
    %1738 = vmatprep.subr.mxu0 0.0
    %1739 = vmatpush2.msra.mxu0 0.0
    %1740 = vmatprep.subr.mxu0 0.0
    %1741 = vmatpush2.msra.mxu0 0.0
    %1742 = vmatprep.subr.mxu0 0.0
    %1743 = vmatpush2.msra.mxu0 0.0
    %1744 = vmatprep.subr.mxu0 0.0
    %1745 = vmatpush2.msra.mxu0 0.0
    %1746 = vmatprep.subr.mxu0 0.0
    %1747 = vmatpush2.msra.mxu0 0.0
    %1748 = vmatprep.subr.mxu0 0.0
    %1749 = vmatpush2.msra.mxu0 0.0
    %1750 = vmatprep.subr.mxu0 0.0
    %1751 = vmatpush2.msra.mxu0 0.0
    %1752 = vmatprep.subr.mxu0 0.0
    %1753 = vmatpush2.msra.mxu0 0.0
    %1754 = vmatprep.subr.mxu0 0.0
    %1755 = vmatpush2.msra.mxu0 0.0
    %1756 = vmatprep.subr.mxu0 0.0
    %1757 = vmatpush2.msra.mxu0 0.0
    %1758 = vmatprep.subr.mxu0 0.0
    %1759 = vmatpush2.msra.mxu0 0.0
    %1760 = vmatprep.subr.mxu0 0.0
    %1761 = vmatpush2.msra.mxu0 0.0
    %1762 = vmatprep.mubr.f32.mxu0 0.0
    %1763 = vmatmul.mubr.f32.gmra.mxu0 %v1659
    %v1764 = vpop.f32.mrf.mxu0
    %v1765 = vadd.f32 %v1696, %v1764
    %v1766 = vpop.f32.mrf.mxu0
    %1767 = vmatprep.mubr.f32.mxu0 0.0
    %1768 = vmatmul.mubr.f32.gmra.mxu0 %v1660
    %v1769 = vpop.f32.mrf.mxu0
    %v1770 = vadd.f32 %v1696, %v1769
    %v1771 = vpop.f32.mrf.mxu0
    %1772 = vmatprep.mubr.f32.mxu0 0.0
    %1773 = vmatmul.mubr.f32.gmra.mxu0 %v1661
    %v1774 = vpop.f32.mrf.mxu0
    %v1775 = vadd.f32 %v1696, %v1774
    %v1776 = vpop.f32.mrf.mxu0
    %1777 = vmatprep.mubr.f32.mxu0 0.0
    %1778 = vmatmul.mubr.f32.gmra.mxu0 %v1662
    %v1779 = vpop.f32.mrf.mxu0
    %v1780 = vadd.f32 %v1696, %v1779
    %v1781 = vpop.f32.mrf.mxu0
    %1782 = vmatprep.mubr.f32.mxu0 0.0
    %1783 = vmatmul.mubr.f32.gmra.mxu0 %v1663
    %v1784 = vpop.f32.mrf.mxu0
    %v1785 = vadd.f32 %v1696, %v1784
    %v1786 = vpop.f32.mrf.mxu0
    %1787 = vmatprep.mubr.f32.mxu0 0.0
    %1788 = vmatmul.mubr.f32.gmra.mxu0 %v1664
    %v1789 = vpop.f32.mrf.mxu0
    %v1790 = vadd.f32 %v1696, %v1789
    %v1791 = vpop.f32.mrf.mxu0
    %1792 = vmatprep.mubr.f32.mxu0 0.0
    %1793 = vmatmul.mubr.f32.gmra.mxu0 %v1665
    %v1794 = vpop.f32.mrf.mxu0
    %v1795 = vadd.f32 %v1696, %v1794
    %v1796 = vpop.f32.mrf.mxu0
    %1797 = vmatprep.mubr.f32.mxu0 0.0
    %1798 = vmatmul.mubr.f32.gmra.mxu0 %v1666
    %v1799 = vpop.f32.mrf.mxu0
    %v1800 = vadd.f32 %v1696, %v1799
    %v1801 = vpop.f32.mrf.mxu0
    %1802 = vmatprep.mubr.f32.mxu0 0.0
    %1803 = vmatmul.mubr.f32.gmra.mxu0 %v1667
    %v1804 = vpop.f32.mrf.mxu0
    %v1805 = vadd.f32 %v1696, %v1804
    %v1806 = vpop.f32.mrf.mxu0
    %1807 = vmatprep.mubr.f32.mxu0 0.0
    %1808 = vmatmul.mubr.f32.gmra.mxu0 %v1668
    %v1809 = vpop.f32.mrf.mxu0
    %v1810 = vadd.f32 %v1696, %v1809
    %v1811 = vpop.f32.mrf.mxu0
    %1812 = vmatprep.mubr.f32.mxu0 0.0
    %1813 = vmatmul.mubr.f32.gmra.mxu0 %v1669
    %v1814 = vpop.f32.mrf.mxu0
    %v1815 = vadd.f32 %v1696, %v1814
    %v1816 = vpop.f32.mrf.mxu0
    %1817 = vmatprep.mubr.f32.mxu0 0.0
    %1818 = vmatmul.mubr.f32.gmra.mxu0 %v1670
    %v1819 = vpop.f32.mrf.mxu0
    %v1820 = vadd.f32 %v1696, %v1819
    %v1821 = vpop.f32.mrf.mxu0
    %1822 = vmatprep.mubr.f32.mxu0 0.0
    %1823 = vmatmul.mubr.f32.gmra.mxu0 %v1671
    %v1824 = vpop.f32.mrf.mxu0
    %v1825 = vadd.f32 %v1696, %v1824
    %v1826 = vpop.f32.mrf.mxu0
    %1827 = vmatprep.mubr.f32.mxu0 0.0
    %1828 = vmatmul.mubr.f32.gmra.mxu0 %v1672
    %v1829 = vpop.f32.mrf.mxu0
    %v1830 = vadd.f32 %v1696, %v1829
    %v1831 = vpop.f32.mrf.mxu0
    %1832 = vmatprep.mubr.f32.mxu0 0.0
    %1833 = vmatmul.mubr.f32.gmra.mxu0 %v1673
    %v1834 = vpop.f32.mrf.mxu0
    %v1835 = vadd.f32 %v1696, %v1834
    %v1836 = vpop.f32.mrf.mxu0
    %1837 = vmatprep.mubr.f32.mxu0 0.0
    %1838 = vmatmul.mubr.f32.gmra.mxu0 %v1674
    %v1839 = vpop.f32.mrf.mxu0
    %v1840 = vadd.f32 %v1696, %v1839
    %v1841 = vpop.f32.mrf.mxu0
    %1842 = vdwg.mxu0
    %1843 = vst [vmem:[%s14] sm:$0xff] %v1765
    %1844 = vst [vmem:[%s14 + $0x8] sm:$0xff] %v1770
    %1845 = vst [vmem:[%s14 + $0x10] sm:$0xff] %v1775
    %1846 = vst [vmem:[%s14 + $0x18] sm:$0xff] %v1780
    %1847 = vst [vmem:[%s14 + $0x20] sm:$0xff] %v1785
    %1848 = vst [vmem:[%s14 + $0x28] sm:$0xff] %v1790
    %1849 = vst [vmem:[%s14 + $0x30] sm:$0xff] %v1795
    %1850 = vst [vmem:[%s14 + $0x38] sm:$0xff] %v1800
    %1851 = vst [vmem:[%s14 + $0x40] sm:$0xff] %v1805
    %1852 = vst [vmem:[%s14 + $0x48] sm:$0xff] %v1810
    %1853 = vst [vmem:[%s14 + $0x50] sm:$0xff] %v1815
    %1854 = vst [vmem:[%s14 + $0x58] sm:$0xff] %v1820
    %1855 = vst [vmem:[%s14 + $0x60] sm:$0xff] %v1825
    %1856 = vst [vmem:[%s14 + $0x68] sm:$0xff] %v1830
    %1857 = vst [vmem:[%s14 + $0x70] sm:$0xff] %v1835
    %1858 = vst [vmem:[%s14 + $0x78] sm:$0xff] %v1840
    // Predicated region
    $region69: #{seconv_model_forward.1} parent=1 // pred_check
      _
    $region70: #{seconv_model_forward.1} parent=1 // pred_check_branch
      %1860 = sbr.rel (0) target = $region72
    $region71: #{seconv_model_forward.1} parent=1 // pred_region
      _
    $region72: #{seconv_model_forward.1} parent=1 // pred_fallthru
      _
    // Predicated region
    $region73: #{seconv_model_forward.1} parent=1 // pred_check
      _
    $region74: #{seconv_model_forward.1} parent=1 // pred_check_branch
      %1862 = sbr.rel (0) target = $region76
    $region75: #{seconv_model_forward.1} parent=1 // pred_region
      _
    $region76: #{seconv_model_forward.1} parent=1 // pred_fallthru
      _
    %1863 = vsyncpa [#allocation4], 1

</llo_original>
